<compile_context>
chip_gen: v5e
topology: v5e:2x2
jax: 0.10.0
libtpu: 0.0.40
codegen_flags: <defaults>
</compile_context>

<pallas_src>
import functools

import jax
import jax.numpy as jnp
from jax.experimental import pallas as pl
from jax.experimental.pallas import tpu as pltpu


def _round_up(x, m):
    return ((x + m - 1) // m) * m


def fnn_kernel(x_ref, w1_ref, b1_ref, w2_ref, b2_ref, o_ref):
    # Linear1 on the MXU: (tb, D_pad)bf16 @ (D_pad, H_pad)bf16 -> f32 accum.
    h = jnp.dot(x_ref[...], w1_ref[...], preferred_element_type=jnp.float32)
    # Bias add + ReLU on the VPU (hidden under MXU/DMA work).
    h = jnp.maximum(h + b1_ref[...], 0.0)
    # Linear2: bf16 operands, f32 accumulation.
    out = jnp.dot(h.astype(jnp.bfloat16), w2_ref[...],
                  preferred_element_type=jnp.float32)
    o_ref[...] = (out + b2_ref[...]).astype(o_ref.dtype)


def prepare_params(w1, b1, w2, b2):
    """One-time weight prep: zero-pad to multiples of 128 and cast to bf16.

    Returns padded params (reused every forward call).  Padding is with zeros,
    so padded hidden units contribute exactly 0 and padded class columns are
    sliced away after the kernel -> numerically equivalent (up to bf16).
    """
    d_in, h = w1.shape
    c = w2.shape[1]
    d_pad = _round_up(d_in, 128)
    h_pad = _round_up(h, 128)
    c_pad = max(128, _round_up(c, 128))

    w1_p = jnp.zeros((d_pad, h_pad), jnp.bfloat16).at[:d_in, :h].set(
        w1.astype(jnp.bfloat16))
    b1_p = jnp.zeros((1, h_pad), jnp.float32).at[0, :h].set(
        b1.astype(jnp.float32))
    w2_p = jnp.zeros((h_pad, c_pad), jnp.bfloat16).at[:h, :c].set(
        w2.astype(jnp.bfloat16))
    b2_p = jnp.zeros((1, c_pad), jnp.float32).at[0, :c].set(
        b2.astype(jnp.float32))
    return w1_p, b1_p, w2_p, b2_p


@functools.partial(jax.jit, static_argnames=("n_classes", "tile_b", "out_dtype"))
def fnn_forward(x, w1_p, b1_p, w2_p, b2_p, *, n_classes,
                tile_b=1024, out_dtype=jnp.bfloat16):
    """Fused FNN forward.  Takes params already padded by prepare_params."""
    B, d_in = x.shape
    d_pad, h_pad = w1_p.shape
    c_pad = w2_p.shape[1]

    # --- Batch tiling: multiple of 16 (bf16 sublane packing). ---
    tb = _round_up(min(tile_b, _round_up(B, 16)), 16)
    num_tiles = -(-B // tb)
    # v7x: keep >= 2 grid steps when the batch allows so the "parallel" axis
    # actually splits across both TensorCores.
    if num_tiles == 1 and B > 16:
        tb = _round_up(-(-B // 2), 16)
        num_tiles = -(-B // tb)
    b_pad = num_tiles * tb

    # --- Single fused pass over x: bf16 cast + row/col zero-pad (under jit).
    x_bf = x.astype(jnp.bfloat16)
    if b_pad != B or d_pad != d_in:
        x_bf = jnp.pad(x_bf, ((0, b_pad - B), (0, d_pad - d_in)))

    # --- VMEM budget for this tiling (double-buffered pipeline). ---
    out_bytes = jnp.dtype(out_dtype).itemsize
    need = (2 * tb * d_pad * 2                      # x tiles (bf16, 2 bufs)
            + 2 * tb * c_pad * out_bytes            # out tiles (2 bufs)
            + 2 * 2 * (d_pad * h_pad + h_pad * c_pad)   # weights (bf16, 2 bufs)
            + 2 * 4 * (h_pad + c_pad)               # biases (f32, 2 bufs)
            + 4 * tb * h_pad)                       # f32 intermediate h
    vmem_limit = min(96 * 1024 * 1024,
                     max(32 * 1024 * 1024, int(1.5 * need)))

    out_padded = pl.pallas_call(
        fnn_kernel,
        out_shape=jax.ShapeDtypeStruct((b_pad, c_pad), out_dtype),
        grid_spec=pltpu.PrefetchScalarGridSpec(
            num_scalar_prefetch=0,
            grid=(num_tiles,),
            in_specs=[
                # x tile walks the batch; weights/biases stay VMEM-resident
                # via constant index_maps.
                pl.BlockSpec((tb, d_pad), lambda i: (i, 0)),
                pl.BlockSpec((d_pad, h_pad), lambda i: (0, 0)),
                pl.BlockSpec((1, h_pad), lambda i: (0, 0)),
                pl.BlockSpec((h_pad, c_pad), lambda i: (0, 0)),
                pl.BlockSpec((1, c_pad), lambda i: (0, 0)),
            ],
            out_specs=pl.BlockSpec((tb, c_pad), lambda i: (i, 0)),
        ),
        compiler_params=pltpu.CompilerParams(
            dimension_semantics=("parallel",),   # shards batch tiles on v7x
            vmem_limit_bytes=vmem_limit,
        ),
    )(x_bf, w1_p, b1_p, w2_p, b2_p)

    # Slice fuses under jit (and with downstream consumers of this jit's
    # output); the padded buffer is never materialized separately.
    return out_padded[:B, :n_classes]


def init_params(key, input_size, hidden_size, n_classes, dtype=jnp.float32):
    # Mimics PyTorch nn.Linear default init:
    # uniform(-1/sqrt(fan_in), 1/sqrt(fan_in)) for weight and bias.
    k1, k2, k3, k4 = jax.random.split(key, 4)
    lim1 = 1.0 / jnp.sqrt(jnp.array(input_size, dtype))
    lim2 = 1.0 / jnp.sqrt(jnp.array(hidden_size, dtype))
    w1 = jax.random.uniform(k1, (input_size, hidden_size), dtype, -lim1, lim1)
    b1 = jax.random.uniform(k2, (hidden_size,), dtype, -lim1, lim1)
    w2 = jax.random.uniform(k3, (hidden_size, n_classes), dtype, -lim2, lim2)
    b2 = jax.random.uniform(k4, (n_classes,), dtype, -lim2, lim2)
    return w1, b1, w2, b2


def _reference(x, w1, b1, w2, b2):
    return jnp.maximum(x @ w1 + b1, 0.0) @ w2 + b2


if __name__ == "__main__":
    # MNIST-style FNN shapes: 784 -> 500 -> 10 (exercises D_in/H/C padding).
    input_size = 784
    hidden_size = 500
    n_classes = 10

    key = jax.random.PRNGKey(0)
    kx, kp = jax.random.split(key)
    w1, b1, w2, b2 = init_params(kp, input_size, hidden_size, n_classes)
    params = prepare_params(w1, b1, w2, b2)   # one-time pad + bf16 cast

    # Small batch: single tile, padding of batch rows + K columns.
    batch = 8
    x = jax.random.normal(kx, (batch, input_size), jnp.float32)
    out = jax.block_until_ready(
        fnn_forward(x, *params, n_classes=n_classes))
    ref = _reference(x, w1, b1, w2, b2)
    assert out.shape == (batch, n_classes)
    assert jnp.allclose(out.astype(jnp.float32), ref, atol=5e-2, rtol=5e-2), (
        float(jnp.max(jnp.abs(out.astype(jnp.float32) - ref))))

    # Larger batch: splits into 2 tiles (even grid -> both TCs on v7x).
    batch2 = 512
    x2 = jax.random.normal(kx, (batch2, input_size), jnp.float32)
    out2 = jax.block_until_ready(
        fnn_forward(x2, *params, n_classes=n_classes))
    ref2 = _reference(x2, w1, b1, w2, b2)
    assert out2.shape == (batch2, n_classes)
    assert jnp.allclose(out2.astype(jnp.float32), ref2, atol=5e-2, rtol=5e-2), (
        float(jnp.max(jnp.abs(out2.astype(jnp.float32) - ref2))))

    # f32-output path (for callers that need full-precision logits).
    out3 = jax.block_until_ready(
        fnn_forward(x, *params, n_classes=n_classes, out_dtype=jnp.float32))
    assert out3.dtype == jnp.float32 and out3.shape == (batch, n_classes)
    assert jnp.allclose(out3, ref, atol=5e-2, rtol=5e-2)

    print("KERNEL_OK")
</pallas_src>

<mosaic_0001>
module attributes {stable_mosaic.version = 11 : i64} {
  func.func @fnn_kernel(%arg0: i32, %arg1: memref<16x896xbf16, #tpu.memory_space<vmem>>, %arg2: memref<896x512xbf16, #tpu.memory_space<vmem>>, %arg3: memref<1x512xf32, #tpu.memory_space<vmem>>, %arg4: memref<512x128xbf16, #tpu.memory_space<vmem>>, %arg5: memref<1x128xf32, #tpu.memory_space<vmem>>, %arg6: memref<16x128xbf16, #tpu.memory_space<vmem>>) attributes {dimension_semantics = [#tpu.dimension_semantics<parallel>], iteration_bounds = array<i64: 1>, scalar_prefetch = 0 : i64, scratch_operands = 0 : i64, tpu.core_type = #tpu.core_type<tc>, window_params = [{transform_indices = @transform_0, window_bounds = array<i64: 16, 896>}, {pipeline_mode = #tpu.pipeline_mode<synchronous>, transform_indices = @transform_1, window_bounds = array<i64: 896, 512>}, {pipeline_mode = #tpu.pipeline_mode<synchronous>, transform_indices = @transform_2, window_bounds = array<i64: 1, 512>}, {pipeline_mode = #tpu.pipeline_mode<synchronous>, transform_indices = @transform_3, window_bounds = array<i64: 512, 128>}, {pipeline_mode = #tpu.pipeline_mode<synchronous>, transform_indices = @transform_4, window_bounds = array<i64: 1, 128>}, {transform_indices = @transform_5, window_bounds = array<i64: 16, 128>}]} {
    %c0 = arith.constant 0 : index
    %c0_0 = arith.constant 0 : index
    %0 = vector.load %arg1[%c0, %c0_0] : memref<16x896xbf16, #tpu.memory_space<vmem>>, vector<16x896xbf16>
    %c0_1 = arith.constant 0 : index
    %c0_2 = arith.constant 0 : index
    %1 = vector.load %arg2[%c0_1, %c0_2] : memref<896x512xbf16, #tpu.memory_space<vmem>>, vector<896x512xbf16>
    %cst = arith.constant dense<0.000000e+00> : vector<16x512xf32>
    %2 = tpu.matmul %0, %1, %cst {dimension_numbers = #tpu.dot_dimension_numbers<[1], [0], [0], [1], [0, 0, 1, 1], [], []>} : vector<16x896xbf16>, vector<896x512xbf16>, vector<16x512xf32> -> vector<16x512xf32>
    %c0_3 = arith.constant 0 : index
    %c0_4 = arith.constant 0 : index
    %3 = vector.load %arg3[%c0_3, %c0_4] : memref<1x512xf32, #tpu.memory_space<vmem>>, vector<1x512xf32>
    %4 = vector.broadcast %3 : vector<1x512xf32> to vector<16x512xf32>
    %5 = arith.addf %2, %4 : vector<16x512xf32>
    %cst_5 = arith.constant 0.000000e+00 : f32
    %6 = vector.broadcast %cst_5 : f32 to vector<16x512xf32>
    %7 = arith.maximumf %5, %6 : vector<16x512xf32>
    %8 = arith.truncf %7 : vector<16x512xf32> to vector<16x512xbf16>
    %c0_6 = arith.constant 0 : index
    %c0_7 = arith.constant 0 : index
    %9 = vector.load %arg4[%c0_6, %c0_7] : memref<512x128xbf16, #tpu.memory_space<vmem>>, vector<512x128xbf16>
    %cst_8 = arith.constant dense<0.000000e+00> : vector<16x128xf32>
    %10 = tpu.matmul %8, %9, %cst_8 {dimension_numbers = #tpu.dot_dimension_numbers<[1], [0], [0], [1], [0, 0, 1, 1], [], []>} : vector<16x512xbf16>, vector<512x128xbf16>, vector<16x128xf32> -> vector<16x128xf32>
    %c0_9 = arith.constant 0 : index
    %c0_10 = arith.constant 0 : index
    %11 = vector.load %arg5[%c0_9, %c0_10] : memref<1x128xf32, #tpu.memory_space<vmem>>, vector<1x128xf32>
    %12 = vector.broadcast %11 : vector<1x128xf32> to vector<16x128xf32>
    %13 = arith.addf %10, %12 : vector<16x128xf32>
    %14 = arith.truncf %13 : vector<16x128xf32> to vector<16x128xbf16>
    %c0_11 = arith.constant 0 : index
    %c0_12 = arith.constant 0 : index
    %15 = vector.load %arg6[%c0_11, %c0_12] : memref<16x128xbf16, #tpu.memory_space<vmem>>, vector<16x128xbf16>
    tpu.vector_store %arg6[%c0_11, %c0_12], %14 {strides = array<i32>} : memref<16x128xbf16, #tpu.memory_space<vmem>>, vector<16x128xbf16>,
    return
  }
  func.func @transform_0(%arg0: i32) -> (i32, i32) {
    %c0_i32 = arith.constant 0 : i32
    %c0_i32_0 = arith.constant 0 : i32
    return %arg0, %c0_i32 : i32, i32
  }
  func.func @transform_1(%arg0: i32) -> (i32, i32) {
    %c0_i32 = arith.constant 0 : i32
    %c0_i32_0 = arith.constant 0 : i32
    %c0_i32_1 = arith.constant 0 : i32
    return %c0_i32, %c0_i32_0 : i32, i32
  }
  func.func @transform_2(%arg0: i32) -> (i32, i32) {
    %c0_i32 = arith.constant 0 : i32
    %c0_i32_0 = arith.constant 0 : i32
    %c0_i32_1 = arith.constant 0 : i32
    return %c0_i32, %c0_i32_0 : i32, i32
  }
  func.func @transform_3(%arg0: i32) -> (i32, i32) {
    %c0_i32 = arith.constant 0 : i32
    %c0_i32_0 = arith.constant 0 : i32
    %c0_i32_1 = arith.constant 0 : i32
    return %c0_i32, %c0_i32_0 : i32, i32
  }
  func.func @transform_4(%arg0: i32) -> (i32, i32) {
    %c0_i32 = arith.constant 0 : i32
    %c0_i32_0 = arith.constant 0 : i32
    %c0_i32_1 = arith.constant 0 : i32
    return %c0_i32, %c0_i32_0 : i32, i32
  }
  func.func @transform_5(%arg0: i32) -> (i32, i32) {
    %c0_i32 = arith.constant 0 : i32
    %c0_i32_0 = arith.constant 0 : i32
    return %arg0, %c0_i32 : i32, i32
  }
}

</mosaic_0001>

<llo_original>
// kernel: fnn_forward.1
$region0: #{fnn_forward.1}
  #allocation0 [shape = 'u32[]', space=smem, size = 0x4, offset = 0x4, fixed_abs, tag = 'smem constant byte address 0x4 - core index']
  #allocation1 [shape = 'u32[72,128]{1,0:T(1,128)}', space=vmem, size = 0x9000, scoped, tag = 'internal scratch']
  %s0 = inlined_call_operand.vmem [shape: bf16[16,896], index: 0, kind: input, shape index: {}]
  %s1 = inlined_call_operand.hbm [shape: bf16[896,512], index: 1, kind: input, shape index: {}]
  %s2 = inlined_call_operand.vmem [shape: f32[1,512], index: 2, kind: input, shape index: {}]
  %s3 = inlined_call_operand.hbm [shape: bf16[512,128], index: 3, kind: input, shape index: {}]
  %s4 = inlined_call_operand.vmem [shape: f32[1,128], index: 4, kind: input, shape index: {}]
  %s5 = inlined_call_operand.vmem [shape: bf16[16,128], index: 5, kind: output, shape index: {}]
  %s6 = sld [smem:[#allocation0]]
  $region38: #{fnn_forward.1} parent=0
    _
  %s8 = ssub.s32 1, %s6
  %s9 = scalar_select 0, %s8, %s6
  $region1: #{fnn_forward.1} parent=0
    #allocation2 [shape = 'u8[917504]{0}', space=vmem, size = 0xe0000, scoped, tag = 'input window, operand 1, single buffered']
    #allocation3 [shape = 's32[1]{0}', space=sflag, size = 0x4, scoped, tag = 'scoped memory for fnn_forward.1']
    #allocation4 [shape = 'u8[131072]{0}', space=vmem, size = 0x20000, scoped, tag = 'input window, operand 3, single buffered']
    #allocation5 [shape = 's32[1]{0}', space=sflag, size = 0x4, scoped, tag = 'scoped memory for fnn_forward.1']
    %10 = vsyncpa [#allocation3], 0
    %11 = vsyncpa [#allocation5], 0
    // Predicated region
    $region2: #{fnn_forward.1} parent=1 // pred_check
      _
    $region3: #{fnn_forward.1} parent=1 // pred_check_branch
      %13 = sbr.rel (0) target = $region5
    $region4: #{fnn_forward.1} parent=1 // pred_region
      _
    $region5: #{fnn_forward.1} parent=1 // pred_fallthru
      _
    // Predicated region
    $region6: #{fnn_forward.1} parent=1 // pred_check
      _
    $region7: #{fnn_forward.1} parent=1 // pred_check_branch
      %15 = sbr.rel (0) target = $region9
    $region8: #{fnn_forward.1} parent=1 // pred_region
      %17 = vsyncadd [#allocation3], 0
      %s18 = sshll.u32 %s1, 4
      %s19 = int_to_ptr.hbm [resolvable:$true] %s18
      %s20 = sshll.u32 [#allocation2], 4
      %s21 = int_to_ptr.vmem [resolvable:$true] %s20
      %26 = dma.hbm_to_vmem [thread:$0]  %s19, 28672, %s21, [#allocation3], 256, 256, 16
    $region9: #{fnn_forward.1} parent=1 // pred_fallthru
      _
    // Predicated region
    $region10: #{fnn_forward.1} parent=1 // pred_check
      _
    $region11: #{fnn_forward.1} parent=1 // pred_check_branch
      %28 = sbr.rel (0) target = $region13
    $region12: #{fnn_forward.1} parent=1 // pred_region
      _
    $region13: #{fnn_forward.1} parent=1 // pred_fallthru
      _
    // Predicated region
    $region14: #{fnn_forward.1} parent=1 // pred_check
      _
    $region15: #{fnn_forward.1} parent=1 // pred_check_branch
      %30 = sbr.rel (0) target = $region17
    $region16: #{fnn_forward.1} parent=1 // pred_region
      %32 = vsyncadd [#allocation5], 0
      %s33 = sshll.u32 %s3, 4
      %s34 = int_to_ptr.hbm [resolvable:$true] %s33
      %s35 = sshll.u32 [#allocation4], 4
      %s36 = int_to_ptr.vmem [resolvable:$true] %s35
      %41 = dma.hbm_to_vmem [thread:$0]  %s34, 4096, %s36, [#allocation5], 64, 64, 4
    $region17: #{fnn_forward.1} parent=1 // pred_fallthru
      _
    // Predicated region
    $region18: #{fnn_forward.1} parent=1 // pred_check
      _
    $region19: #{fnn_forward.1} parent=1 // pred_check_branch
      %43 = sbr.rel (0) target = $region21
    $region20: #{fnn_forward.1} parent=1 // pred_region
      _
    $region21: #{fnn_forward.1} parent=1 // pred_fallthru
      _
    // Predicated region
    $region22: #{fnn_forward.1} parent=1 // pred_check
      _
    $region23: #{fnn_forward.1} parent=1 // pred_check_branch
      %45 = sbr.rel (0) target = $region25
    $region24: #{fnn_forward.1} parent=1 // pred_region
      %47 = dma.done [#allocation3], 28672
    $region25: #{fnn_forward.1} parent=1 // pred_fallthru
      _
    // Predicated region
    $region26: #{fnn_forward.1} parent=1 // pred_check
      _
    $region27: #{fnn_forward.1} parent=1 // pred_check_branch
      %49 = sbr.rel (0) target = $region29
    $region28: #{fnn_forward.1} parent=1 // pred_region
      %51 = dma.done [#allocation5], 4096
    $region29: #{fnn_forward.1} parent=1 // pred_fallthru
      _
    %v52 = vld [vmem:[%s0] sm:$0xff]
    %v53 = vld [vmem:[%s0 + $0x8] sm:$0xff]
    %v54 = vld [vmem:[%s0 + $0x10] sm:$0xff]
    %v55 = vld [vmem:[%s0 + $0x18] sm:$0xf]
    %v56 = vld [vmem:[%s0 + $0x1c] sm:$0xff]
    %v57 = vld [vmem:[%s0 + $0x24] sm:$0xff]
    %v58 = vld [vmem:[%s0 + $0x2c] sm:$0xff]
    %v59 = vld [vmem:[%s0 + $0x34] sm:$0xf]
    %v60 = vld [vmem:[#allocation2] sm:$0xff]
    %v61 = vld [vmem:[#allocation2 + $0x8] sm:$0xff]
    %v62 = vld [vmem:[#allocation2 + $0x10] sm:$0xff]
    %v63 = vld [vmem:[#allocation2 + $0x18] sm:$0xff]
    %v64 = vld [vmem:[#allocation2 + $0x20] sm:$0xff]
    %v65 = vld [vmem:[#allocation2 + $0x28] sm:$0xff]
    %v66 = vld [vmem:[#allocation2 + $0x30] sm:$0xff]
    %v67 = vld [vmem:[#allocation2 + $0x38] sm:$0xff]
    %v68 = vld [vmem:[#allocation2 + $0x40] sm:$0xff]
    %v69 = vld [vmem:[#allocation2 + $0x48] sm:$0xff]
    %v70 = vld [vmem:[#allocation2 + $0x50] sm:$0xff]
    %v71 = vld [vmem:[#allocation2 + $0x58] sm:$0xff]
    %v72 = vld [vmem:[#allocation2 + $0x60] sm:$0xff]
    %v73 = vld [vmem:[#allocation2 + $0x68] sm:$0xff]
    %v74 = vld [vmem:[#allocation2 + $0x70] sm:$0xff]
    %v75 = vld [vmem:[#allocation2 + $0x78] sm:$0xff]
    %v76 = vld [vmem:[#allocation2 + $0x80] sm:$0xff]
    %v77 = vld [vmem:[#allocation2 + $0x88] sm:$0xff]
    %v78 = vld [vmem:[#allocation2 + $0x90] sm:$0xff]
    %v79 = vld [vmem:[#allocation2 + $0x98] sm:$0xff]
    %v80 = vld [vmem:[#allocation2 + $0xa0] sm:$0xff]
    %v81 = vld [vmem:[#allocation2 + $0xa8] sm:$0xff]
    %v82 = vld [vmem:[#allocation2 + $0xb0] sm:$0xff]
    %v83 = vld [vmem:[#allocation2 + $0xb8] sm:$0xff]
    %v84 = vld [vmem:[#allocation2 + $0xc0] sm:$0xff]
    %v85 = vld [vmem:[#allocation2 + $0xc8] sm:$0xff]
    %v86 = vld [vmem:[#allocation2 + $0xd0] sm:$0xff]
    %v87 = vld [vmem:[#allocation2 + $0xd8] sm:$0xff]
    %v88 = vld [vmem:[#allocation2 + $0xe0] sm:$0xff]
    %v89 = vld [vmem:[#allocation2 + $0xe8] sm:$0xff]
    %v90 = vld [vmem:[#allocation2 + $0xf0] sm:$0xff]
    %v91 = vld [vmem:[#allocation2 + $0xf8] sm:$0xff]
    %v92 = vld [vmem:[#allocation2 + $0x100] sm:$0xff]
    %v93 = vld [vmem:[#allocation2 + $0x108] sm:$0xff]
    %v94 = vld [vmem:[#allocation2 + $0x110] sm:$0xff]
    %v95 = vld [vmem:[#allocation2 + $0x118] sm:$0xff]
    %v96 = vld [vmem:[#allocation2 + $0x120] sm:$0xff]
    %v97 = vld [vmem:[#allocation2 + $0x128] sm:$0xff]
    %v98 = vld [vmem:[#allocation2 + $0x130] sm:$0xff]
    %v99 = vld [vmem:[#allocation2 + $0x138] sm:$0xff]
    %v100 = vld [vmem:[#allocation2 + $0x140] sm:$0xff]
    %v101 = vld [vmem:[#allocation2 + $0x148] sm:$0xff]
    %v102 = vld [vmem:[#allocation2 + $0x150] sm:$0xff]
    %v103 = vld [vmem:[#allocation2 + $0x158] sm:$0xff]
    %v104 = vld [vmem:[#allocation2 + $0x160] sm:$0xff]
    %v105 = vld [vmem:[#allocation2 + $0x168] sm:$0xff]
    %v106 = vld [vmem:[#allocation2 + $0x170] sm:$0xff]
    %v107 = vld [vmem:[#allocation2 + $0x178] sm:$0xff]
    %v108 = vld [vmem:[#allocation2 + $0x180] sm:$0xff]
    %v109 = vld [vmem:[#allocation2 + $0x188] sm:$0xff]
    %v110 = vld [vmem:[#allocation2 + $0x190] sm:$0xff]
    %v111 = vld [vmem:[#allocation2 + $0x198] sm:$0xff]
    %v112 = vld [vmem:[#allocation2 + $0x1a0] sm:$0xff]
    %v113 = vld [vmem:[#allocation2 + $0x1a8] sm:$0xff]
    %v114 = vld [vmem:[#allocation2 + $0x1b0] sm:$0xff]
    %v115 = vld [vmem:[#allocation2 + $0x1b8] sm:$0xff]
    %v116 = vld [vmem:[#allocation2 + $0x1c0] sm:$0xff]
    %v117 = vld [vmem:[#allocation2 + $0x1c8] sm:$0xff]
    %v118 = vld [vmem:[#allocation2 + $0x1d0] sm:$0xff]
    %v119 = vld [vmem:[#allocation2 + $0x1d8] sm:$0xff]
    %v120 = vld [vmem:[#allocation2 + $0x1e0] sm:$0xff]
    %v121 = vld [vmem:[#allocation2 + $0x1e8] sm:$0xff]
    %v122 = vld [vmem:[#allocation2 + $0x1f0] sm:$0xff]
    %v123 = vld [vmem:[#allocation2 + $0x1f8] sm:$0xff]
    %v124 = vld [vmem:[#allocation2 + $0x200] sm:$0xff]
    %v125 = vld [vmem:[#allocation2 + $0x208] sm:$0xff]
    %v126 = vld [vmem:[#allocation2 + $0x210] sm:$0xff]
    %v127 = vld [vmem:[#allocation2 + $0x218] sm:$0xff]
    %v128 = vld [vmem:[#allocation2 + $0x220] sm:$0xff]
    %v129 = vld [vmem:[#allocation2 + $0x228] sm:$0xff]
    %v130 = vld [vmem:[#allocation2 + $0x230] sm:$0xff]
    %v131 = vld [vmem:[#allocation2 + $0x238] sm:$0xff]
    %v132 = vld [vmem:[#allocation2 + $0x240] sm:$0xff]
    %v133 = vld [vmem:[#allocation2 + $0x248] sm:$0xff]
    %v134 = vld [vmem:[#allocation2 + $0x250] sm:$0xff]
    %v135 = vld [vmem:[#allocation2 + $0x258] sm:$0xff]
    %v136 = vld [vmem:[#allocation2 + $0x260] sm:$0xff]
    %v137 = vld [vmem:[#allocation2 + $0x268] sm:$0xff]
    %v138 = vld [vmem:[#allocation2 + $0x270] sm:$0xff]
    %v139 = vld [vmem:[#allocation2 + $0x278] sm:$0xff]
    %v140 = vld [vmem:[#allocation2 + $0x280] sm:$0xff]
    %v141 = vld [vmem:[#allocation2 + $0x288] sm:$0xff]
    %v142 = vld [vmem:[#allocation2 + $0x290] sm:$0xff]
    %v143 = vld [vmem:[#allocation2 + $0x298] sm:$0xff]
    %v144 = vld [vmem:[#allocation2 + $0x2a0] sm:$0xff]
    %v145 = vld [vmem:[#allocation2 + $0x2a8] sm:$0xff]
    %v146 = vld [vmem:[#allocation2 + $0x2b0] sm:$0xff]
    %v147 = vld [vmem:[#allocation2 + $0x2b8] sm:$0xff]
    %v148 = vld [vmem:[#allocation2 + $0x2c0] sm:$0xff]
    %v149 = vld [vmem:[#allocation2 + $0x2c8] sm:$0xff]
    %v150 = vld [vmem:[#allocation2 + $0x2d0] sm:$0xff]
    %v151 = vld [vmem:[#allocation2 + $0x2d8] sm:$0xff]
    %v152 = vld [vmem:[#allocation2 + $0x2e0] sm:$0xff]
    %v153 = vld [vmem:[#allocation2 + $0x2e8] sm:$0xff]
    %v154 = vld [vmem:[#allocation2 + $0x2f0] sm:$0xff]
    %v155 = vld [vmem:[#allocation2 + $0x2f8] sm:$0xff]
    %v156 = vld [vmem:[#allocation2 + $0x300] sm:$0xff]
    %v157 = vld [vmem:[#allocation2 + $0x308] sm:$0xff]
    %v158 = vld [vmem:[#allocation2 + $0x310] sm:$0xff]
    %v159 = vld [vmem:[#allocation2 + $0x318] sm:$0xff]
    %v160 = vld [vmem:[#allocation2 + $0x320] sm:$0xff]
    %v161 = vld [vmem:[#allocation2 + $0x328] sm:$0xff]
    %v162 = vld [vmem:[#allocation2 + $0x330] sm:$0xff]
    %v163 = vld [vmem:[#allocation2 + $0x338] sm:$0xff]
    %v164 = vld [vmem:[#allocation2 + $0x340] sm:$0xff]
    %v165 = vld [vmem:[#allocation2 + $0x348] sm:$0xff]
    %v166 = vld [vmem:[#allocation2 + $0x350] sm:$0xff]
    %v167 = vld [vmem:[#allocation2 + $0x358] sm:$0xff]
    %v168 = vld [vmem:[#allocation2 + $0x360] sm:$0xff]
    %v169 = vld [vmem:[#allocation2 + $0x368] sm:$0xff]
    %v170 = vld [vmem:[#allocation2 + $0x370] sm:$0xff]
    %v171 = vld [vmem:[#allocation2 + $0x378] sm:$0xff]
    %v172 = vld [vmem:[#allocation2 + $0x380] sm:$0xff]
    %v173 = vld [vmem:[#allocation2 + $0x388] sm:$0xff]
    %v174 = vld [vmem:[#allocation2 + $0x390] sm:$0xff]
    %v175 = vld [vmem:[#allocation2 + $0x398] sm:$0xff]
    %v176 = vld [vmem:[#allocation2 + $0x3a0] sm:$0xff]
    %v177 = vld [vmem:[#allocation2 + $0x3a8] sm:$0xff]
    %v178 = vld [vmem:[#allocation2 + $0x3b0] sm:$0xff]
    %v179 = vld [vmem:[#allocation2 + $0x3b8] sm:$0xff]
    %v180 = vld [vmem:[#allocation2 + $0x3c0] sm:$0xff]
    %v181 = vld [vmem:[#allocation2 + $0x3c8] sm:$0xff]
    %v182 = vld [vmem:[#allocation2 + $0x3d0] sm:$0xff]
    %v183 = vld [vmem:[#allocation2 + $0x3d8] sm:$0xff]
    %v184 = vld [vmem:[#allocation2 + $0x3e0] sm:$0xff]
    %v185 = vld [vmem:[#allocation2 + $0x3e8] sm:$0xff]
    %v186 = vld [vmem:[#allocation2 + $0x3f0] sm:$0xff]
    %v187 = vld [vmem:[#allocation2 + $0x3f8] sm:$0xff]
    %v188 = vld [vmem:[#allocation2 + $0x400] sm:$0xff]
    %v189 = vld [vmem:[#allocation2 + $0x408] sm:$0xff]
    %v190 = vld [vmem:[#allocation2 + $0x410] sm:$0xff]
    %v191 = vld [vmem:[#allocation2 + $0x418] sm:$0xff]
    %v192 = vld [vmem:[#allocation2 + $0x420] sm:$0xff]
    %v193 = vld [vmem:[#allocation2 + $0x428] sm:$0xff]
    %v194 = vld [vmem:[#allocation2 + $0x430] sm:$0xff]
    %v195 = vld [vmem:[#allocation2 + $0x438] sm:$0xff]
    %v196 = vld [vmem:[#allocation2 + $0x440] sm:$0xff]
    %v197 = vld [vmem:[#allocation2 + $0x448] sm:$0xff]
    %v198 = vld [vmem:[#allocation2 + $0x450] sm:$0xff]
    %v199 = vld [vmem:[#allocation2 + $0x458] sm:$0xff]
    %v200 = vld [vmem:[#allocation2 + $0x460] sm:$0xff]
    %v201 = vld [vmem:[#allocation2 + $0x468] sm:$0xff]
    %v202 = vld [vmem:[#allocation2 + $0x470] sm:$0xff]
    %v203 = vld [vmem:[#allocation2 + $0x478] sm:$0xff]
    %v204 = vld [vmem:[#allocation2 + $0x480] sm:$0xff]
    %v205 = vld [vmem:[#allocation2 + $0x488] sm:$0xff]
    %v206 = vld [vmem:[#allocation2 + $0x490] sm:$0xff]
    %v207 = vld [vmem:[#allocation2 + $0x498] sm:$0xff]
    %v208 = vld [vmem:[#allocation2 + $0x4a0] sm:$0xff]
    %v209 = vld [vmem:[#allocation2 + $0x4a8] sm:$0xff]
    %v210 = vld [vmem:[#allocation2 + $0x4b0] sm:$0xff]
    %v211 = vld [vmem:[#allocation2 + $0x4b8] sm:$0xff]
    %v212 = vld [vmem:[#allocation2 + $0x4c0] sm:$0xff]
    %v213 = vld [vmem:[#allocation2 + $0x4c8] sm:$0xff]
    %v214 = vld [vmem:[#allocation2 + $0x4d0] sm:$0xff]
    %v215 = vld [vmem:[#allocation2 + $0x4d8] sm:$0xff]
    %v216 = vld [vmem:[#allocation2 + $0x4e0] sm:$0xff]
    %v217 = vld [vmem:[#allocation2 + $0x4e8] sm:$0xff]
    %v218 = vld [vmem:[#allocation2 + $0x4f0] sm:$0xff]
    %v219 = vld [vmem:[#allocation2 + $0x4f8] sm:$0xff]
    %v220 = vld [vmem:[#allocation2 + $0x500] sm:$0xff]
    %v221 = vld [vmem:[#allocation2 + $0x508] sm:$0xff]
    %v222 = vld [vmem:[#allocation2 + $0x510] sm:$0xff]
    %v223 = vld [vmem:[#allocation2 + $0x518] sm:$0xff]
    %v224 = vld [vmem:[#allocation2 + $0x520] sm:$0xff]
    %v225 = vld [vmem:[#allocation2 + $0x528] sm:$0xff]
    %v226 = vld [vmem:[#allocation2 + $0x530] sm:$0xff]
    %v227 = vld [vmem:[#allocation2 + $0x538] sm:$0xff]
    %v228 = vld [vmem:[#allocation2 + $0x540] sm:$0xff]
    %v229 = vld [vmem:[#allocation2 + $0x548] sm:$0xff]
    %v230 = vld [vmem:[#allocation2 + $0x550] sm:$0xff]
    %v231 = vld [vmem:[#allocation2 + $0x558] sm:$0xff]
    %v232 = vld [vmem:[#allocation2 + $0x560] sm:$0xff]
    %v233 = vld [vmem:[#allocation2 + $0x568] sm:$0xff]
    %v234 = vld [vmem:[#allocation2 + $0x570] sm:$0xff]
    %v235 = vld [vmem:[#allocation2 + $0x578] sm:$0xff]
    %v236 = vld [vmem:[#allocation2 + $0x580] sm:$0xff]
    %v237 = vld [vmem:[#allocation2 + $0x588] sm:$0xff]
    %v238 = vld [vmem:[#allocation2 + $0x590] sm:$0xff]
    %v239 = vld [vmem:[#allocation2 + $0x598] sm:$0xff]
    %v240 = vld [vmem:[#allocation2 + $0x5a0] sm:$0xff]
    %v241 = vld [vmem:[#allocation2 + $0x5a8] sm:$0xff]
    %v242 = vld [vmem:[#allocation2 + $0x5b0] sm:$0xff]
    %v243 = vld [vmem:[#allocation2 + $0x5b8] sm:$0xff]
    %v244 = vld [vmem:[#allocation2 + $0x5c0] sm:$0xff]
    %v245 = vld [vmem:[#allocation2 + $0x5c8] sm:$0xff]
    %v246 = vld [vmem:[#allocation2 + $0x5d0] sm:$0xff]
    %v247 = vld [vmem:[#allocation2 + $0x5d8] sm:$0xff]
    %v248 = vld [vmem:[#allocation2 + $0x5e0] sm:$0xff]
    %v249 = vld [vmem:[#allocation2 + $0x5e8] sm:$0xff]
    %v250 = vld [vmem:[#allocation2 + $0x5f0] sm:$0xff]
    %v251 = vld [vmem:[#allocation2 + $0x5f8] sm:$0xff]
    %v252 = vld [vmem:[#allocation2 + $0x600] sm:$0xff]
    %v253 = vld [vmem:[#allocation2 + $0x608] sm:$0xff]
    %v254 = vld [vmem:[#allocation2 + $0x610] sm:$0xff]
    %v255 = vld [vmem:[#allocation2 + $0x618] sm:$0xff]
    %v256 = vld [vmem:[#allocation2 + $0x620] sm:$0xff]
    %v257 = vld [vmem:[#allocation2 + $0x628] sm:$0xff]
    %v258 = vld [vmem:[#allocation2 + $0x630] sm:$0xff]
    %v259 = vld [vmem:[#allocation2 + $0x638] sm:$0xff]
    %v260 = vld [vmem:[#allocation2 + $0x640] sm:$0xff]
    %v261 = vld [vmem:[#allocation2 + $0x648] sm:$0xff]
    %v262 = vld [vmem:[#allocation2 + $0x650] sm:$0xff]
    %v263 = vld [vmem:[#allocation2 + $0x658] sm:$0xff]
    %v264 = vld [vmem:[#allocation2 + $0x660] sm:$0xff]
    %v265 = vld [vmem:[#allocation2 + $0x668] sm:$0xff]
    %v266 = vld [vmem:[#allocation2 + $0x670] sm:$0xff]
    %v267 = vld [vmem:[#allocation2 + $0x678] sm:$0xff]
    %v268 = vld [vmem:[#allocation2 + $0x680] sm:$0xff]
    %v269 = vld [vmem:[#allocation2 + $0x688] sm:$0xff]
    %v270 = vld [vmem:[#allocation2 + $0x690] sm:$0xff]
    %v271 = vld [vmem:[#allocation2 + $0x698] sm:$0xff]
    %v272 = vld [vmem:[#allocation2 + $0x6a0] sm:$0xff]
    %v273 = vld [vmem:[#allocation2 + $0x6a8] sm:$0xff]
    %v274 = vld [vmem:[#allocation2 + $0x6b0] sm:$0xff]
    %v275 = vld [vmem:[#allocation2 + $0x6b8] sm:$0xff]
    %v276 = vld [vmem:[#allocation2 + $0x6c0] sm:$0xff]
    %v277 = vld [vmem:[#allocation2 + $0x6c8] sm:$0xff]
    %v278 = vld [vmem:[#allocation2 + $0x6d0] sm:$0xff]
    %v279 = vld [vmem:[#allocation2 + $0x6d8] sm:$0xff]
    %v280 = vld [vmem:[#allocation2 + $0x6e0] sm:$0xff]
    %v281 = vld [vmem:[#allocation2 + $0x6e8] sm:$0xff]
    %v282 = vld [vmem:[#allocation2 + $0x6f0] sm:$0xff]
    %v283 = vld [vmem:[#allocation2 + $0x6f8] sm:$0xff]
    %v284 = vld [vmem:[%s2] sm:$0xf]
    %v286 = vperm.slane %v284, 0
    %v287 = vperm.slane %v284, 1
    %v288 = vperm.slane %v284, 2
    %v289 = vperm.slane %v284, 3
    %v302 = vunpack.c.l.b16 %v52
    %v303 = vunpack.c.h.b16 %v52
    %v304 = vunpack.c.l.b16 %v53
    %v305 = vunpack.c.h.b16 %v53
    %v306 = vunpack.c.l.b16 %v54
    %v307 = vunpack.c.h.b16 %v54
    %v308 = vunpack.c.l.b16 %v55
    %v309 = vunpack.c.l.b16 %v56
    %v310 = vunpack.c.h.b16 %v56
    %v311 = vunpack.c.l.b16 %v57
    %v312 = vunpack.c.h.b16 %v57
    %v313 = vunpack.c.l.b16 %v58
    %v314 = vunpack.c.h.b16 %v58
    %v315 = vunpack.c.l.b16 %v59
    %v316 = vpack.c.b16 %v309, %v302
    %v317 = vpack.c.b16 %v310, %v303
    %v318 = vpack.c.b16 %v311, %v304
    %v319 = vpack.c.b16 %v312, %v305
    %v320 = vpack.c.b16 %v313, %v306
    %v321 = vpack.c.b16 %v314, %v307
    %v322 = vpack.c.b16 %v315, %v308
    %v554 = vunpack.c.l.b16 %v60
    %v555 = vunpack.c.h.b16 %v60
    %v556 = vunpack.c.l.b16 %v61
    %v557 = vunpack.c.h.b16 %v61
    %v558 = vunpack.c.l.b16 %v62
    %v559 = vunpack.c.h.b16 %v62
    %v560 = vunpack.c.l.b16 %v63
    %v561 = vunpack.c.h.b16 %v63
    %v562 = vunpack.c.l.b16 %v64
    %v563 = vunpack.c.h.b16 %v64
    %v564 = vunpack.c.l.b16 %v65
    %v565 = vunpack.c.h.b16 %v65
    %v566 = vunpack.c.l.b16 %v66
    %v567 = vunpack.c.h.b16 %v66
    %v568 = vunpack.c.l.b16 %v67
    %v569 = vunpack.c.h.b16 %v67
    %v570 = vunpack.c.l.b16 %v68
    %v571 = vunpack.c.h.b16 %v68
    %v572 = vunpack.c.l.b16 %v69
    %v573 = vunpack.c.h.b16 %v69
    %v574 = vunpack.c.l.b16 %v70
    %v575 = vunpack.c.h.b16 %v70
    %v576 = vunpack.c.l.b16 %v71
    %v577 = vunpack.c.h.b16 %v71
    %v578 = vunpack.c.l.b16 %v72
    %v579 = vunpack.c.h.b16 %v72
    %v580 = vunpack.c.l.b16 %v73
    %v581 = vunpack.c.h.b16 %v73
    %v582 = vunpack.c.l.b16 %v74
    %v583 = vunpack.c.h.b16 %v74
    %v584 = vunpack.c.l.b16 %v75
    %v585 = vunpack.c.h.b16 %v75
    %v586 = vunpack.c.l.b16 %v76
    %v587 = vunpack.c.h.b16 %v76
    %v588 = vunpack.c.l.b16 %v77
    %v589 = vunpack.c.h.b16 %v77
    %v590 = vunpack.c.l.b16 %v78
    %v591 = vunpack.c.h.b16 %v78
    %v592 = vunpack.c.l.b16 %v79
    %v593 = vunpack.c.h.b16 %v79
    %v594 = vunpack.c.l.b16 %v80
    %v595 = vunpack.c.h.b16 %v80
    %v596 = vunpack.c.l.b16 %v81
    %v597 = vunpack.c.h.b16 %v81
    %v598 = vunpack.c.l.b16 %v82
    %v599 = vunpack.c.h.b16 %v82
    %v600 = vunpack.c.l.b16 %v83
    %v601 = vunpack.c.h.b16 %v83
    %v602 = vunpack.c.l.b16 %v84
    %v603 = vunpack.c.h.b16 %v84
    %v604 = vunpack.c.l.b16 %v85
    %v605 = vunpack.c.h.b16 %v85
    %v606 = vunpack.c.l.b16 %v86
    %v607 = vunpack.c.h.b16 %v86
    %v608 = vunpack.c.l.b16 %v87
    %v609 = vunpack.c.h.b16 %v87
    %v610 = vunpack.c.l.b16 %v88
    %v611 = vunpack.c.h.b16 %v88
    %v612 = vunpack.c.l.b16 %v89
    %v613 = vunpack.c.h.b16 %v89
    %v614 = vunpack.c.l.b16 %v90
    %v615 = vunpack.c.h.b16 %v90
    %v616 = vunpack.c.l.b16 %v91
    %v617 = vunpack.c.h.b16 %v91
    %v618 = vunpack.c.l.b16 %v92
    %v619 = vunpack.c.h.b16 %v92
    %v620 = vunpack.c.l.b16 %v93
    %v621 = vunpack.c.h.b16 %v93
    %v622 = vunpack.c.l.b16 %v94
    %v623 = vunpack.c.h.b16 %v94
    %v624 = vunpack.c.l.b16 %v95
    %v625 = vunpack.c.h.b16 %v95
    %v626 = vunpack.c.l.b16 %v96
    %v627 = vunpack.c.h.b16 %v96
    %v628 = vunpack.c.l.b16 %v97
    %v629 = vunpack.c.h.b16 %v97
    %v630 = vunpack.c.l.b16 %v98
    %v631 = vunpack.c.h.b16 %v98
    %v632 = vunpack.c.l.b16 %v99
    %v633 = vunpack.c.h.b16 %v99
    %v634 = vunpack.c.l.b16 %v100
    %v635 = vunpack.c.h.b16 %v100
    %v636 = vunpack.c.l.b16 %v101
    %v637 = vunpack.c.h.b16 %v101
    %v638 = vunpack.c.l.b16 %v102
    %v639 = vunpack.c.h.b16 %v102
    %v640 = vunpack.c.l.b16 %v103
    %v641 = vunpack.c.h.b16 %v103
    %v642 = vunpack.c.l.b16 %v104
    %v643 = vunpack.c.h.b16 %v104
    %v644 = vunpack.c.l.b16 %v105
    %v645 = vunpack.c.h.b16 %v105
    %v646 = vunpack.c.l.b16 %v106
    %v647 = vunpack.c.h.b16 %v106
    %v648 = vunpack.c.l.b16 %v107
    %v649 = vunpack.c.h.b16 %v107
    %v650 = vunpack.c.l.b16 %v108
    %v651 = vunpack.c.h.b16 %v108
    %v652 = vunpack.c.l.b16 %v109
    %v653 = vunpack.c.h.b16 %v109
    %v654 = vunpack.c.l.b16 %v110
    %v655 = vunpack.c.h.b16 %v110
    %v656 = vunpack.c.l.b16 %v111
    %v657 = vunpack.c.h.b16 %v111
    %v658 = vunpack.c.l.b16 %v112
    %v659 = vunpack.c.h.b16 %v112
    %v660 = vunpack.c.l.b16 %v113
    %v661 = vunpack.c.h.b16 %v113
    %v662 = vunpack.c.l.b16 %v114
    %v663 = vunpack.c.h.b16 %v114
    %v664 = vunpack.c.l.b16 %v115
    %v665 = vunpack.c.h.b16 %v115
    %v666 = vunpack.c.l.b16 %v116
    %v667 = vunpack.c.h.b16 %v116
    %v668 = vunpack.c.l.b16 %v117
    %v669 = vunpack.c.h.b16 %v117
    %v670 = vunpack.c.l.b16 %v118
    %v671 = vunpack.c.h.b16 %v118
    %v672 = vunpack.c.l.b16 %v119
    %v673 = vunpack.c.h.b16 %v119
    %v674 = vunpack.c.l.b16 %v120
    %v675 = vunpack.c.h.b16 %v120
    %v676 = vunpack.c.l.b16 %v121
    %v677 = vunpack.c.h.b16 %v121
    %v678 = vunpack.c.l.b16 %v122
    %v679 = vunpack.c.h.b16 %v122
    %v680 = vunpack.c.l.b16 %v123
    %v681 = vunpack.c.h.b16 %v123
    %v682 = vunpack.c.l.b16 %v124
    %v683 = vunpack.c.h.b16 %v124
    %v684 = vunpack.c.l.b16 %v125
    %v685 = vunpack.c.h.b16 %v125
    %v686 = vunpack.c.l.b16 %v126
    %v687 = vunpack.c.h.b16 %v126
    %v688 = vunpack.c.l.b16 %v127
    %v689 = vunpack.c.h.b16 %v127
    %v690 = vunpack.c.l.b16 %v128
    %v691 = vunpack.c.h.b16 %v128
    %v692 = vunpack.c.l.b16 %v129
    %v693 = vunpack.c.h.b16 %v129
    %v694 = vunpack.c.l.b16 %v130
    %v695 = vunpack.c.h.b16 %v130
    %v696 = vunpack.c.l.b16 %v131
    %v697 = vunpack.c.h.b16 %v131
    %v698 = vunpack.c.l.b16 %v132
    %v699 = vunpack.c.h.b16 %v132
    %v700 = vunpack.c.l.b16 %v133
    %v701 = vunpack.c.h.b16 %v133
    %v702 = vunpack.c.l.b16 %v134
    %v703 = vunpack.c.h.b16 %v134
    %v704 = vunpack.c.l.b16 %v135
    %v705 = vunpack.c.h.b16 %v135
    %v706 = vunpack.c.l.b16 %v136
    %v707 = vunpack.c.h.b16 %v136
    %v708 = vunpack.c.l.b16 %v137
    %v709 = vunpack.c.h.b16 %v137
    %v710 = vunpack.c.l.b16 %v138
    %v711 = vunpack.c.h.b16 %v138
    %v712 = vunpack.c.l.b16 %v139
    %v713 = vunpack.c.h.b16 %v139
    %v714 = vunpack.c.l.b16 %v140
    %v715 = vunpack.c.h.b16 %v140
    %v716 = vunpack.c.l.b16 %v141
    %v717 = vunpack.c.h.b16 %v141
    %v718 = vunpack.c.l.b16 %v142
    %v719 = vunpack.c.h.b16 %v142
    %v720 = vunpack.c.l.b16 %v143
    %v721 = vunpack.c.h.b16 %v143
    %v722 = vunpack.c.l.b16 %v144
    %v723 = vunpack.c.h.b16 %v144
    %v724 = vunpack.c.l.b16 %v145
    %v725 = vunpack.c.h.b16 %v145
    %v726 = vunpack.c.l.b16 %v146
    %v727 = vunpack.c.h.b16 %v146
    %v728 = vunpack.c.l.b16 %v147
    %v729 = vunpack.c.h.b16 %v147
    %v730 = vunpack.c.l.b16 %v148
    %v731 = vunpack.c.h.b16 %v148
    %v732 = vunpack.c.l.b16 %v149
    %v733 = vunpack.c.h.b16 %v149
    %v734 = vunpack.c.l.b16 %v150
    %v735 = vunpack.c.h.b16 %v150
    %v736 = vunpack.c.l.b16 %v151
    %v737 = vunpack.c.h.b16 %v151
    %v738 = vunpack.c.l.b16 %v152
    %v739 = vunpack.c.h.b16 %v152
    %v740 = vunpack.c.l.b16 %v153
    %v741 = vunpack.c.h.b16 %v153
    %v742 = vunpack.c.l.b16 %v154
    %v743 = vunpack.c.h.b16 %v154
    %v744 = vunpack.c.l.b16 %v155
    %v745 = vunpack.c.h.b16 %v155
    %v746 = vunpack.c.l.b16 %v156
    %v747 = vunpack.c.h.b16 %v156
    %v748 = vunpack.c.l.b16 %v157
    %v749 = vunpack.c.h.b16 %v157
    %v750 = vunpack.c.l.b16 %v158
    %v751 = vunpack.c.h.b16 %v158
    %v752 = vunpack.c.l.b16 %v159
    %v753 = vunpack.c.h.b16 %v159
    %v754 = vunpack.c.l.b16 %v160
    %v755 = vunpack.c.h.b16 %v160
    %v756 = vunpack.c.l.b16 %v161
    %v757 = vunpack.c.h.b16 %v161
    %v758 = vunpack.c.l.b16 %v162
    %v759 = vunpack.c.h.b16 %v162
    %v760 = vunpack.c.l.b16 %v163
    %v761 = vunpack.c.h.b16 %v163
    %v762 = vunpack.c.l.b16 %v164
    %v763 = vunpack.c.h.b16 %v164
    %v764 = vunpack.c.l.b16 %v165
    %v765 = vunpack.c.h.b16 %v165
    %v766 = vunpack.c.l.b16 %v166
    %v767 = vunpack.c.h.b16 %v166
    %v768 = vunpack.c.l.b16 %v167
    %v769 = vunpack.c.h.b16 %v167
    %v770 = vunpack.c.l.b16 %v168
    %v771 = vunpack.c.h.b16 %v168
    %v772 = vunpack.c.l.b16 %v169
    %v773 = vunpack.c.h.b16 %v169
    %v774 = vunpack.c.l.b16 %v170
    %v775 = vunpack.c.h.b16 %v170
    %v776 = vunpack.c.l.b16 %v171
    %v777 = vunpack.c.h.b16 %v171
    %v778 = vunpack.c.l.b16 %v172
    %v779 = vunpack.c.h.b16 %v172
    %v780 = vunpack.c.l.b16 %v173
    %v781 = vunpack.c.h.b16 %v173
    %v782 = vunpack.c.l.b16 %v174
    %v783 = vunpack.c.h.b16 %v174
    %v784 = vunpack.c.l.b16 %v175
    %v785 = vunpack.c.h.b16 %v175
    %v786 = vunpack.c.l.b16 %v176
    %v787 = vunpack.c.h.b16 %v176
    %v788 = vunpack.c.l.b16 %v177
    %v789 = vunpack.c.h.b16 %v177
    %v790 = vunpack.c.l.b16 %v178
    %v791 = vunpack.c.h.b16 %v178
    %v792 = vunpack.c.l.b16 %v179
    %v793 = vunpack.c.h.b16 %v179
    %v794 = vunpack.c.l.b16 %v180
    %v795 = vunpack.c.h.b16 %v180
    %v796 = vunpack.c.l.b16 %v181
    %v797 = vunpack.c.h.b16 %v181
    %v798 = vunpack.c.l.b16 %v182
    %v799 = vunpack.c.h.b16 %v182
    %v800 = vunpack.c.l.b16 %v183
    %v801 = vunpack.c.h.b16 %v183
    %v802 = vunpack.c.l.b16 %v184
    %v803 = vunpack.c.h.b16 %v184
    %v804 = vunpack.c.l.b16 %v185
    %v805 = vunpack.c.h.b16 %v185
    %v806 = vunpack.c.l.b16 %v186
    %v807 = vunpack.c.h.b16 %v186
    %v808 = vunpack.c.l.b16 %v187
    %v809 = vunpack.c.h.b16 %v187
    %v810 = vunpack.c.l.b16 %v188
    %v811 = vunpack.c.h.b16 %v188
    %v812 = vunpack.c.l.b16 %v189
    %v813 = vunpack.c.h.b16 %v189
    %v814 = vunpack.c.l.b16 %v190
    %v815 = vunpack.c.h.b16 %v190
    %v816 = vunpack.c.l.b16 %v191
    %v817 = vunpack.c.h.b16 %v191
    %v818 = vunpack.c.l.b16 %v192
    %v819 = vunpack.c.h.b16 %v192
    %v820 = vunpack.c.l.b16 %v193
    %v821 = vunpack.c.h.b16 %v193
    %v822 = vunpack.c.l.b16 %v194
    %v823 = vunpack.c.h.b16 %v194
    %v824 = vunpack.c.l.b16 %v195
    %v825 = vunpack.c.h.b16 %v195
    %v826 = vunpack.c.l.b16 %v196
    %v827 = vunpack.c.h.b16 %v196
    %v828 = vunpack.c.l.b16 %v197
    %v829 = vunpack.c.h.b16 %v197
    %v830 = vunpack.c.l.b16 %v198
    %v831 = vunpack.c.h.b16 %v198
    %v832 = vunpack.c.l.b16 %v199
    %v833 = vunpack.c.h.b16 %v199
    %v834 = vunpack.c.l.b16 %v200
    %v835 = vunpack.c.h.b16 %v200
    %v836 = vunpack.c.l.b16 %v201
    %v837 = vunpack.c.h.b16 %v201
    %v838 = vunpack.c.l.b16 %v202
    %v839 = vunpack.c.h.b16 %v202
    %v840 = vunpack.c.l.b16 %v203
    %v841 = vunpack.c.h.b16 %v203
    %v842 = vunpack.c.l.b16 %v204
    %v843 = vunpack.c.h.b16 %v204
    %v844 = vunpack.c.l.b16 %v205
    %v845 = vunpack.c.h.b16 %v205
    %v846 = vunpack.c.l.b16 %v206
    %v847 = vunpack.c.h.b16 %v206
    %v848 = vunpack.c.l.b16 %v207
    %v849 = vunpack.c.h.b16 %v207
    %v850 = vunpack.c.l.b16 %v208
    %v851 = vunpack.c.h.b16 %v208
    %v852 = vunpack.c.l.b16 %v209
    %v853 = vunpack.c.h.b16 %v209
    %v854 = vunpack.c.l.b16 %v210
    %v855 = vunpack.c.h.b16 %v210
    %v856 = vunpack.c.l.b16 %v211
    %v857 = vunpack.c.h.b16 %v211
    %v858 = vunpack.c.l.b16 %v212
    %v859 = vunpack.c.h.b16 %v212
    %v860 = vunpack.c.l.b16 %v213
    %v861 = vunpack.c.h.b16 %v213
    %v862 = vunpack.c.l.b16 %v214
    %v863 = vunpack.c.h.b16 %v214
    %v864 = vunpack.c.l.b16 %v215
    %v865 = vunpack.c.h.b16 %v215
    %v866 = vunpack.c.l.b16 %v216
    %v867 = vunpack.c.h.b16 %v216
    %v868 = vunpack.c.l.b16 %v217
    %v869 = vunpack.c.h.b16 %v217
    %v870 = vunpack.c.l.b16 %v218
    %v871 = vunpack.c.h.b16 %v218
    %v872 = vunpack.c.l.b16 %v219
    %v873 = vunpack.c.h.b16 %v219
    %v874 = vunpack.c.l.b16 %v220
    %v875 = vunpack.c.h.b16 %v220
    %v876 = vunpack.c.l.b16 %v221
    %v877 = vunpack.c.h.b16 %v221
    %v878 = vunpack.c.l.b16 %v222
    %v879 = vunpack.c.h.b16 %v222
    %v880 = vunpack.c.l.b16 %v223
    %v881 = vunpack.c.h.b16 %v223
    %v882 = vunpack.c.l.b16 %v224
    %v883 = vunpack.c.h.b16 %v224
    %v884 = vunpack.c.l.b16 %v225
    %v885 = vunpack.c.h.b16 %v225
    %v886 = vunpack.c.l.b16 %v226
    %v887 = vunpack.c.h.b16 %v226
    %v888 = vunpack.c.l.b16 %v227
    %v889 = vunpack.c.h.b16 %v227
    %v890 = vunpack.c.l.b16 %v228
    %v891 = vunpack.c.h.b16 %v228
    %v892 = vunpack.c.l.b16 %v229
    %v893 = vunpack.c.h.b16 %v229
    %v894 = vunpack.c.l.b16 %v230
    %v895 = vunpack.c.h.b16 %v230
    %v896 = vunpack.c.l.b16 %v231
    %v897 = vunpack.c.h.b16 %v231
    %v898 = vunpack.c.l.b16 %v232
    %v899 = vunpack.c.h.b16 %v232
    %v900 = vunpack.c.l.b16 %v233
    %v901 = vunpack.c.h.b16 %v233
    %v902 = vunpack.c.l.b16 %v234
    %v903 = vunpack.c.h.b16 %v234
    %v904 = vunpack.c.l.b16 %v235
    %v905 = vunpack.c.h.b16 %v235
    %v906 = vunpack.c.l.b16 %v236
    %v907 = vunpack.c.h.b16 %v236
    %v908 = vunpack.c.l.b16 %v237
    %v909 = vunpack.c.h.b16 %v237
    %v910 = vunpack.c.l.b16 %v238
    %v911 = vunpack.c.h.b16 %v238
    %v912 = vunpack.c.l.b16 %v239
    %v913 = vunpack.c.h.b16 %v239
    %v914 = vunpack.c.l.b16 %v240
    %v915 = vunpack.c.h.b16 %v240
    %v916 = vunpack.c.l.b16 %v241
    %v917 = vunpack.c.h.b16 %v241
    %v918 = vunpack.c.l.b16 %v242
    %v919 = vunpack.c.h.b16 %v242
    %v920 = vunpack.c.l.b16 %v243
    %v921 = vunpack.c.h.b16 %v243
    %v922 = vunpack.c.l.b16 %v244
    %v923 = vunpack.c.h.b16 %v244
    %v924 = vunpack.c.l.b16 %v245
    %v925 = vunpack.c.h.b16 %v245
    %v926 = vunpack.c.l.b16 %v246
    %v927 = vunpack.c.h.b16 %v246
    %v928 = vunpack.c.l.b16 %v247
    %v929 = vunpack.c.h.b16 %v247
    %v930 = vunpack.c.l.b16 %v248
    %v931 = vunpack.c.h.b16 %v248
    %v932 = vunpack.c.l.b16 %v249
    %v933 = vunpack.c.h.b16 %v249
    %v934 = vunpack.c.l.b16 %v250
    %v935 = vunpack.c.h.b16 %v250
    %v936 = vunpack.c.l.b16 %v251
    %v937 = vunpack.c.h.b16 %v251
    %v938 = vunpack.c.l.b16 %v252
    %v939 = vunpack.c.h.b16 %v252
    %v940 = vunpack.c.l.b16 %v253
    %v941 = vunpack.c.h.b16 %v253
    %v942 = vunpack.c.l.b16 %v254
    %v943 = vunpack.c.h.b16 %v254
    %v944 = vunpack.c.l.b16 %v255
    %v945 = vunpack.c.h.b16 %v255
    %v946 = vunpack.c.l.b16 %v256
    %v947 = vunpack.c.h.b16 %v256
    %v948 = vunpack.c.l.b16 %v257
    %v949 = vunpack.c.h.b16 %v257
    %v950 = vunpack.c.l.b16 %v258
    %v951 = vunpack.c.h.b16 %v258
    %v952 = vunpack.c.l.b16 %v259
    %v953 = vunpack.c.h.b16 %v259
    %v954 = vunpack.c.l.b16 %v260
    %v955 = vunpack.c.h.b16 %v260
    %v956 = vunpack.c.l.b16 %v261
    %v957 = vunpack.c.h.b16 %v261
    %v958 = vunpack.c.l.b16 %v262
    %v959 = vunpack.c.h.b16 %v262
    %v960 = vunpack.c.l.b16 %v263
    %v961 = vunpack.c.h.b16 %v263
    %v962 = vunpack.c.l.b16 %v264
    %v963 = vunpack.c.h.b16 %v264
    %v964 = vunpack.c.l.b16 %v265
    %v965 = vunpack.c.h.b16 %v265
    %v966 = vunpack.c.l.b16 %v266
    %v967 = vunpack.c.h.b16 %v266
    %v968 = vunpack.c.l.b16 %v267
    %v969 = vunpack.c.h.b16 %v267
    %v970 = vunpack.c.l.b16 %v268
    %v971 = vunpack.c.h.b16 %v268
    %v972 = vunpack.c.l.b16 %v269
    %v973 = vunpack.c.h.b16 %v269
    %v974 = vunpack.c.l.b16 %v270
    %v975 = vunpack.c.h.b16 %v270
    %v976 = vunpack.c.l.b16 %v271
    %v977 = vunpack.c.h.b16 %v271
    %v978 = vunpack.c.l.b16 %v272
    %v979 = vunpack.c.h.b16 %v272
    %v980 = vunpack.c.l.b16 %v273
    %v981 = vunpack.c.h.b16 %v273
    %v982 = vunpack.c.l.b16 %v274
    %v983 = vunpack.c.h.b16 %v274
    %v984 = vunpack.c.l.b16 %v275
    %v985 = vunpack.c.h.b16 %v275
    %v986 = vunpack.c.l.b16 %v276
    %v987 = vunpack.c.h.b16 %v276
    %v988 = vunpack.c.l.b16 %v277
    %v989 = vunpack.c.h.b16 %v277
    %v990 = vunpack.c.l.b16 %v278
    %v991 = vunpack.c.h.b16 %v278
    %v992 = vunpack.c.l.b16 %v279
    %v993 = vunpack.c.h.b16 %v279
    %v994 = vunpack.c.l.b16 %v280
    %v995 = vunpack.c.h.b16 %v280
    %v996 = vunpack.c.l.b16 %v281
    %v997 = vunpack.c.h.b16 %v281
    %v998 = vunpack.c.l.b16 %v282
    %v999 = vunpack.c.h.b16 %v282
    %v1000 = vunpack.c.l.b16 %v283
    %v1001 = vunpack.c.h.b16 %v283
    %v1002 = vpack.c.b16 %v558, %v554
    %v1003 = vpack.c.b16 %v559, %v555
    %v1004 = vpack.c.b16 %v560, %v556
    %v1005 = vpack.c.b16 %v561, %v557
    %v1006 = vpack.c.b16 %v566, %v562
    %v1007 = vpack.c.b16 %v567, %v563
    %v1008 = vpack.c.b16 %v568, %v564
    %v1009 = vpack.c.b16 %v569, %v565
    %v1010 = vpack.c.b16 %v574, %v570
    %v1011 = vpack.c.b16 %v575, %v571
    %v1012 = vpack.c.b16 %v576, %v572
    %v1013 = vpack.c.b16 %v577, %v573
    %v1014 = vpack.c.b16 %v582, %v578
    %v1015 = vpack.c.b16 %v583, %v579
    %v1016 = vpack.c.b16 %v584, %v580
    %v1017 = vpack.c.b16 %v585, %v581
    %v1018 = vpack.c.b16 %v590, %v586
    %v1019 = vpack.c.b16 %v591, %v587
    %v1020 = vpack.c.b16 %v592, %v588
    %v1021 = vpack.c.b16 %v593, %v589
    %v1022 = vpack.c.b16 %v598, %v594
    %v1023 = vpack.c.b16 %v599, %v595
    %v1024 = vpack.c.b16 %v600, %v596
    %v1025 = vpack.c.b16 %v601, %v597
    %v1026 = vpack.c.b16 %v606, %v602
    %v1027 = vpack.c.b16 %v607, %v603
    %v1028 = vpack.c.b16 %v608, %v604
    %v1029 = vpack.c.b16 %v609, %v605
    %v1030 = vpack.c.b16 %v614, %v610
    %v1031 = vpack.c.b16 %v615, %v611
    %v1032 = vpack.c.b16 %v616, %v612
    %v1033 = vpack.c.b16 %v617, %v613
    %v1034 = vpack.c.b16 %v622, %v618
    %v1035 = vpack.c.b16 %v623, %v619
    %v1036 = vpack.c.b16 %v624, %v620
    %v1037 = vpack.c.b16 %v625, %v621
    %v1038 = vpack.c.b16 %v630, %v626
    %v1039 = vpack.c.b16 %v631, %v627
    %v1040 = vpack.c.b16 %v632, %v628
    %v1041 = vpack.c.b16 %v633, %v629
    %v1042 = vpack.c.b16 %v638, %v634
    %v1043 = vpack.c.b16 %v639, %v635
    %v1044 = vpack.c.b16 %v640, %v636
    %v1045 = vpack.c.b16 %v641, %v637
    %v1046 = vpack.c.b16 %v646, %v642
    %v1047 = vpack.c.b16 %v647, %v643
    %v1048 = vpack.c.b16 %v648, %v644
    %v1049 = vpack.c.b16 %v649, %v645
    %v1050 = vpack.c.b16 %v654, %v650
    %v1051 = vpack.c.b16 %v655, %v651
    %v1052 = vpack.c.b16 %v656, %v652
    %v1053 = vpack.c.b16 %v657, %v653
    %v1054 = vpack.c.b16 %v662, %v658
    %v1055 = vpack.c.b16 %v663, %v659
    %v1056 = vpack.c.b16 %v664, %v660
    %v1057 = vpack.c.b16 %v665, %v661
    %v1058 = vpack.c.b16 %v670, %v666
    %v1059 = vpack.c.b16 %v671, %v667
    %v1060 = vpack.c.b16 %v672, %v668
    %v1061 = vpack.c.b16 %v673, %v669
    %v1062 = vpack.c.b16 %v678, %v674
    %v1063 = vpack.c.b16 %v679, %v675
    %v1064 = vpack.c.b16 %v680, %v676
    %v1065 = vpack.c.b16 %v681, %v677
    %v1066 = vpack.c.b16 %v686, %v682
    %v1067 = vpack.c.b16 %v687, %v683
    %v1068 = vpack.c.b16 %v688, %v684
    %v1069 = vpack.c.b16 %v689, %v685
    %v1070 = vpack.c.b16 %v694, %v690
    %v1071 = vpack.c.b16 %v695, %v691
    %v1072 = vpack.c.b16 %v696, %v692
    %v1073 = vpack.c.b16 %v697, %v693
    %v1074 = vpack.c.b16 %v702, %v698
    %v1075 = vpack.c.b16 %v703, %v699
    %v1076 = vpack.c.b16 %v704, %v700
    %v1077 = vpack.c.b16 %v705, %v701
    %v1078 = vpack.c.b16 %v710, %v706
    %v1079 = vpack.c.b16 %v711, %v707
    %v1080 = vpack.c.b16 %v712, %v708
    %v1081 = vpack.c.b16 %v713, %v709
    %v1082 = vpack.c.b16 %v718, %v714
    %v1083 = vpack.c.b16 %v719, %v715
    %v1084 = vpack.c.b16 %v720, %v716
    %v1085 = vpack.c.b16 %v721, %v717
    %v1086 = vpack.c.b16 %v726, %v722
    %v1087 = vpack.c.b16 %v727, %v723
    %v1088 = vpack.c.b16 %v728, %v724
    %v1089 = vpack.c.b16 %v729, %v725
    %v1090 = vpack.c.b16 %v734, %v730
    %v1091 = vpack.c.b16 %v735, %v731
    %v1092 = vpack.c.b16 %v736, %v732
    %v1093 = vpack.c.b16 %v737, %v733
    %v1094 = vpack.c.b16 %v742, %v738
    %v1095 = vpack.c.b16 %v743, %v739
    %v1096 = vpack.c.b16 %v744, %v740
    %v1097 = vpack.c.b16 %v745, %v741
    %v1098 = vpack.c.b16 %v750, %v746
    %v1099 = vpack.c.b16 %v751, %v747
    %v1100 = vpack.c.b16 %v752, %v748
    %v1101 = vpack.c.b16 %v753, %v749
    %v1102 = vpack.c.b16 %v758, %v754
    %v1103 = vpack.c.b16 %v759, %v755
    %v1104 = vpack.c.b16 %v760, %v756
    %v1105 = vpack.c.b16 %v761, %v757
    %v1106 = vpack.c.b16 %v766, %v762
    %v1107 = vpack.c.b16 %v767, %v763
    %v1108 = vpack.c.b16 %v768, %v764
    %v1109 = vpack.c.b16 %v769, %v765
    %v1110 = vpack.c.b16 %v774, %v770
    %v1111 = vpack.c.b16 %v775, %v771
    %v1112 = vpack.c.b16 %v776, %v772
    %v1113 = vpack.c.b16 %v777, %v773
    %v1114 = vpack.c.b16 %v782, %v778
    %v1115 = vpack.c.b16 %v783, %v779
    %v1116 = vpack.c.b16 %v784, %v780
    %v1117 = vpack.c.b16 %v785, %v781
    %v1118 = vpack.c.b16 %v790, %v786
    %v1119 = vpack.c.b16 %v791, %v787
    %v1120 = vpack.c.b16 %v792, %v788
    %v1121 = vpack.c.b16 %v793, %v789
    %v1122 = vpack.c.b16 %v798, %v794
    %v1123 = vpack.c.b16 %v799, %v795
    %v1124 = vpack.c.b16 %v800, %v796
    %v1125 = vpack.c.b16 %v801, %v797
    %v1126 = vpack.c.b16 %v806, %v802
    %v1127 = vpack.c.b16 %v807, %v803
    %v1128 = vpack.c.b16 %v808, %v804
    %v1129 = vpack.c.b16 %v809, %v805
    %v1130 = vpack.c.b16 %v814, %v810
    %v1131 = vpack.c.b16 %v815, %v811
    %v1132 = vpack.c.b16 %v816, %v812
    %v1133 = vpack.c.b16 %v817, %v813
    %v1134 = vpack.c.b16 %v822, %v818
    %v1135 = vpack.c.b16 %v823, %v819
    %v1136 = vpack.c.b16 %v824, %v820
    %v1137 = vpack.c.b16 %v825, %v821
    %v1138 = vpack.c.b16 %v830, %v826
    %v1139 = vpack.c.b16 %v831, %v827
    %v1140 = vpack.c.b16 %v832, %v828
    %v1141 = vpack.c.b16 %v833, %v829
    %v1142 = vpack.c.b16 %v838, %v834
    %v1143 = vpack.c.b16 %v839, %v835
    %v1144 = vpack.c.b16 %v840, %v836
    %v1145 = vpack.c.b16 %v841, %v837
    %v1146 = vpack.c.b16 %v846, %v842
    %v1147 = vpack.c.b16 %v847, %v843
    %v1148 = vpack.c.b16 %v848, %v844
    %v1149 = vpack.c.b16 %v849, %v845
    %v1150 = vpack.c.b16 %v854, %v850
    %v1151 = vpack.c.b16 %v855, %v851
    %v1152 = vpack.c.b16 %v856, %v852
    %v1153 = vpack.c.b16 %v857, %v853
    %v1154 = vpack.c.b16 %v862, %v858
    %v1155 = vpack.c.b16 %v863, %v859
    %v1156 = vpack.c.b16 %v864, %v860
    %v1157 = vpack.c.b16 %v865, %v861
    %v1158 = vpack.c.b16 %v870, %v866
    %v1159 = vpack.c.b16 %v871, %v867
    %v1160 = vpack.c.b16 %v872, %v868
    %v1161 = vpack.c.b16 %v873, %v869
    %v1162 = vpack.c.b16 %v878, %v874
    %v1163 = vpack.c.b16 %v879, %v875
    %v1164 = vpack.c.b16 %v880, %v876
    %v1165 = vpack.c.b16 %v881, %v877
    %v1166 = vpack.c.b16 %v886, %v882
    %v1167 = vpack.c.b16 %v887, %v883
    %v1168 = vpack.c.b16 %v888, %v884
    %v1169 = vpack.c.b16 %v889, %v885
    %v1170 = vpack.c.b16 %v894, %v890
    %v1171 = vpack.c.b16 %v895, %v891
    %v1172 = vpack.c.b16 %v896, %v892
    %v1173 = vpack.c.b16 %v897, %v893
    %v1174 = vpack.c.b16 %v902, %v898
    %v1175 = vpack.c.b16 %v903, %v899
    %v1176 = vpack.c.b16 %v904, %v900
    %v1177 = vpack.c.b16 %v905, %v901
    %v1178 = vpack.c.b16 %v910, %v906
    %v1179 = vpack.c.b16 %v911, %v907
    %v1180 = vpack.c.b16 %v912, %v908
    %v1181 = vpack.c.b16 %v913, %v909
    %v1182 = vpack.c.b16 %v918, %v914
    %v1183 = vpack.c.b16 %v919, %v915
    %v1184 = vpack.c.b16 %v920, %v916
    %v1185 = vpack.c.b16 %v921, %v917
    %v1186 = vpack.c.b16 %v926, %v922
    %v1187 = vpack.c.b16 %v927, %v923
    %v1188 = vpack.c.b16 %v928, %v924
    %v1189 = vpack.c.b16 %v929, %v925
    %v1190 = vpack.c.b16 %v934, %v930
    %v1191 = vpack.c.b16 %v935, %v931
    %v1192 = vpack.c.b16 %v936, %v932
    %v1193 = vpack.c.b16 %v937, %v933
    %v1194 = vpack.c.b16 %v942, %v938
    %v1195 = vpack.c.b16 %v943, %v939
    %v1196 = vpack.c.b16 %v944, %v940
    %v1197 = vpack.c.b16 %v945, %v941
    %v1198 = vpack.c.b16 %v950, %v946
    %v1199 = vpack.c.b16 %v951, %v947
    %v1200 = vpack.c.b16 %v952, %v948
    %v1201 = vpack.c.b16 %v953, %v949
    %v1202 = vpack.c.b16 %v958, %v954
    %v1203 = vpack.c.b16 %v959, %v955
    %v1204 = vpack.c.b16 %v960, %v956
    %v1205 = vpack.c.b16 %v961, %v957
    %v1206 = vpack.c.b16 %v966, %v962
    %v1207 = vpack.c.b16 %v967, %v963
    %v1208 = vpack.c.b16 %v968, %v964
    %v1209 = vpack.c.b16 %v969, %v965
    %v1210 = vpack.c.b16 %v974, %v970
    %v1211 = vpack.c.b16 %v975, %v971
    %v1212 = vpack.c.b16 %v976, %v972
    %v1213 = vpack.c.b16 %v977, %v973
    %v1214 = vpack.c.b16 %v982, %v978
    %v1215 = vpack.c.b16 %v983, %v979
    %v1216 = vpack.c.b16 %v984, %v980
    %v1217 = vpack.c.b16 %v985, %v981
    %v1218 = vpack.c.b16 %v990, %v986
    %v1219 = vpack.c.b16 %v991, %v987
    %v1220 = vpack.c.b16 %v992, %v988
    %v1221 = vpack.c.b16 %v993, %v989
    %v1222 = vpack.c.b16 %v998, %v994
    %v1223 = vpack.c.b16 %v999, %v995
    %v1224 = vpack.c.b16 %v1000, %v996
    %v1225 = vpack.c.b16 %v1001, %v997
    %1450 = vmatpush.bf16.msra.mxu0 %v1030
    %1451 = vmatpush.bf16.msra.mxu0 %v1026
    %1452 = vmatpush.bf16.msra.mxu0 %v1022
    %1453 = vmatpush.bf16.msra.mxu0 %v1018
    %1454 = vmatpush.bf16.msra.mxu0 %v1014
    %1455 = vmatpush.bf16.msra.mxu0 %v1010
    %1456 = vmatpush.bf16.msra.mxu0 %v1006
    %1457 = vmatpush.bf16.msra.mxu0 %v1002
    %1458 = vmatmul.bf16.gmra.mxu0 %v316
    %v1459 = vpop.f32.mrf.mxu0
    %v1460 = vadd.f32 %v286, %v1459
    %v1461 = vpop.f32.mrf.mxu0
    %v1462 = vadd.f32 %v286, %v1461
    %1463 = vdwg.mxu0
    %1464 = vmatpush.bf16.msra.mxu0 %v1062
    %1465 = vmatpush.bf16.msra.mxu0 %v1058
    %1466 = vmatpush.bf16.msra.mxu0 %v1054
    %1467 = vmatpush.bf16.msra.mxu0 %v1050
    %1468 = vmatpush.bf16.msra.mxu0 %v1046
    %1469 = vmatpush.bf16.msra.mxu0 %v1042
    %1470 = vmatpush.bf16.msra.mxu0 %v1038
    %1471 = vmatpush.bf16.msra.mxu0 %v1034
    %1472 = vmatmul.bf16.gmra.mxu0 %v317
    %v1473 = vpop.f32.mrf.mxu0
    %v1474 = vadd.f32 %v1460, %v1473
    %v1475 = vpop.f32.mrf.mxu0
    %v1476 = vadd.f32 %v1462, %v1475
    %1477 = vdwg.mxu0
    %1478 = vmatpush.bf16.msra.mxu0 %v1094
    %1479 = vmatpush.bf16.msra.mxu0 %v1090
    %1480 = vmatpush.bf16.msra.mxu0 %v1086
    %1481 = vmatpush.bf16.msra.mxu0 %v1082
    %1482 = vmatpush.bf16.msra.mxu0 %v1078
    %1483 = vmatpush.bf16.msra.mxu0 %v1074
    %1484 = vmatpush.bf16.msra.mxu0 %v1070
    %1485 = vmatpush.bf16.msra.mxu0 %v1066
    %1486 = vmatmul.bf16.gmra.mxu0 %v318
    %v1487 = vpop.f32.mrf.mxu0
    %v1488 = vadd.f32 %v1474, %v1487
    %v1489 = vpop.f32.mrf.mxu0
    %v1490 = vadd.f32 %v1476, %v1489
    %1491 = vdwg.mxu0
    %1492 = vmatpush.bf16.msra.mxu0 %v1126
    %1493 = vmatpush.bf16.msra.mxu0 %v1122
    %1494 = vmatpush.bf16.msra.mxu0 %v1118
    %1495 = vmatpush.bf16.msra.mxu0 %v1114
    %1496 = vmatpush.bf16.msra.mxu0 %v1110
    %1497 = vmatpush.bf16.msra.mxu0 %v1106
    %1498 = vmatpush.bf16.msra.mxu0 %v1102
    %1499 = vmatpush.bf16.msra.mxu0 %v1098
    %1500 = vmatmul.bf16.gmra.mxu0 %v319
    %v1501 = vpop.f32.mrf.mxu0
    %v1502 = vadd.f32 %v1488, %v1501
    %v1503 = vpop.f32.mrf.mxu0
    %v1504 = vadd.f32 %v1490, %v1503
    %1505 = vdwg.mxu0
    %1506 = vmatpush.bf16.msra.mxu0 %v1158
    %1507 = vmatpush.bf16.msra.mxu0 %v1154
    %1508 = vmatpush.bf16.msra.mxu0 %v1150
    %1509 = vmatpush.bf16.msra.mxu0 %v1146
    %1510 = vmatpush.bf16.msra.mxu0 %v1142
    %1511 = vmatpush.bf16.msra.mxu0 %v1138
    %1512 = vmatpush.bf16.msra.mxu0 %v1134
    %1513 = vmatpush.bf16.msra.mxu0 %v1130
    %1514 = vmatmul.bf16.gmra.mxu0 %v320
    %v1515 = vpop.f32.mrf.mxu0
    %v1516 = vadd.f32 %v1502, %v1515
    %v1517 = vpop.f32.mrf.mxu0
    %v1518 = vadd.f32 %v1504, %v1517
    %1519 = vdwg.mxu0
    %1520 = vmatpush.bf16.msra.mxu0 %v1190
    %1521 = vmatpush.bf16.msra.mxu0 %v1186
    %1522 = vmatpush.bf16.msra.mxu0 %v1182
    %1523 = vmatpush.bf16.msra.mxu0 %v1178
    %1524 = vmatpush.bf16.msra.mxu0 %v1174
    %1525 = vmatpush.bf16.msra.mxu0 %v1170
    %1526 = vmatpush.bf16.msra.mxu0 %v1166
    %1527 = vmatpush.bf16.msra.mxu0 %v1162
    %1528 = vmatmul.bf16.gmra.mxu0 %v321
    %v1529 = vpop.f32.mrf.mxu0
    %v1530 = vadd.f32 %v1516, %v1529
    %v1531 = vpop.f32.mrf.mxu0
    %v1532 = vadd.f32 %v1518, %v1531
    %1533 = vdwg.mxu0
    %1534 = vmatpush.bf16.msra.mxu0 %v1222
    %1535 = vmatpush.bf16.msra.mxu0 %v1218
    %1536 = vmatpush.bf16.msra.mxu0 %v1214
    %1537 = vmatpush.bf16.msra.mxu0 %v1210
    %1538 = vmatpush.bf16.msra.mxu0 %v1206
    %1539 = vmatpush.bf16.msra.mxu0 %v1202
    %1540 = vmatpush.bf16.msra.mxu0 %v1198
    %1541 = vmatpush.bf16.msra.mxu0 %v1194
    %1542 = vmatmul.bf16.gmra.mxu0 %v322
    %v1543 = vpop.f32.mrf.mxu0
    %v1544 = vadd.f32 %v1530, %v1543
    %v1545 = vpop.f32.mrf.mxu0
    %v1546 = vadd.f32 %v1532, %v1545
    %1547 = vdwg.mxu0
    %1548 = vmatpush.bf16.msra.mxu0 %v1031
    %1549 = vmatpush.bf16.msra.mxu0 %v1027
    %1550 = vmatpush.bf16.msra.mxu0 %v1023
    %1551 = vmatpush.bf16.msra.mxu0 %v1019
    %1552 = vmatpush.bf16.msra.mxu0 %v1015
    %1553 = vmatpush.bf16.msra.mxu0 %v1011
    %1554 = vmatpush.bf16.msra.mxu0 %v1007
    %1555 = vmatpush.bf16.msra.mxu0 %v1003
    %1556 = vmatmul.bf16.gmra.mxu0 %v316
    %v1557 = vpop.f32.mrf.mxu0
    %v1558 = vadd.f32 %v287, %v1557
    %v1559 = vpop.f32.mrf.mxu0
    %v1560 = vadd.f32 %v287, %v1559
    %1561 = vdwg.mxu0
    %1562 = vmatpush.bf16.msra.mxu0 %v1063
    %1563 = vmatpush.bf16.msra.mxu0 %v1059
    %1564 = vmatpush.bf16.msra.mxu0 %v1055
    %1565 = vmatpush.bf16.msra.mxu0 %v1051
    %1566 = vmatpush.bf16.msra.mxu0 %v1047
    %1567 = vmatpush.bf16.msra.mxu0 %v1043
    %1568 = vmatpush.bf16.msra.mxu0 %v1039
    %1569 = vmatpush.bf16.msra.mxu0 %v1035
    %1570 = vmatmul.bf16.gmra.mxu0 %v317
    %v1571 = vpop.f32.mrf.mxu0
    %v1572 = vadd.f32 %v1558, %v1571
    %v1573 = vpop.f32.mrf.mxu0
    %v1574 = vadd.f32 %v1560, %v1573
    %1575 = vdwg.mxu0
    %1576 = vmatpush.bf16.msra.mxu0 %v1095
    %1577 = vmatpush.bf16.msra.mxu0 %v1091
    %1578 = vmatpush.bf16.msra.mxu0 %v1087
    %1579 = vmatpush.bf16.msra.mxu0 %v1083
    %1580 = vmatpush.bf16.msra.mxu0 %v1079
    %1581 = vmatpush.bf16.msra.mxu0 %v1075
    %1582 = vmatpush.bf16.msra.mxu0 %v1071
    %1583 = vmatpush.bf16.msra.mxu0 %v1067
    %1584 = vmatmul.bf16.gmra.mxu0 %v318
    %v1585 = vpop.f32.mrf.mxu0
    %v1586 = vadd.f32 %v1572, %v1585
    %v1587 = vpop.f32.mrf.mxu0
    %v1588 = vadd.f32 %v1574, %v1587
    %1589 = vdwg.mxu0
    %1590 = vmatpush.bf16.msra.mxu0 %v1127
    %1591 = vmatpush.bf16.msra.mxu0 %v1123
    %1592 = vmatpush.bf16.msra.mxu0 %v1119
    %1593 = vmatpush.bf16.msra.mxu0 %v1115
    %1594 = vmatpush.bf16.msra.mxu0 %v1111
    %1595 = vmatpush.bf16.msra.mxu0 %v1107
    %1596 = vmatpush.bf16.msra.mxu0 %v1103
    %1597 = vmatpush.bf16.msra.mxu0 %v1099
    %1598 = vmatmul.bf16.gmra.mxu0 %v319
    %v1599 = vpop.f32.mrf.mxu0
    %v1600 = vadd.f32 %v1586, %v1599
    %v1601 = vpop.f32.mrf.mxu0
    %v1602 = vadd.f32 %v1588, %v1601
    %1603 = vdwg.mxu0
    %1604 = vmatpush.bf16.msra.mxu0 %v1159
    %1605 = vmatpush.bf16.msra.mxu0 %v1155
    %1606 = vmatpush.bf16.msra.mxu0 %v1151
    %1607 = vmatpush.bf16.msra.mxu0 %v1147
    %1608 = vmatpush.bf16.msra.mxu0 %v1143
    %1609 = vmatpush.bf16.msra.mxu0 %v1139
    %1610 = vmatpush.bf16.msra.mxu0 %v1135
    %1611 = vmatpush.bf16.msra.mxu0 %v1131
    %1612 = vmatmul.bf16.gmra.mxu0 %v320
    %v1613 = vpop.f32.mrf.mxu0
    %v1614 = vadd.f32 %v1600, %v1613
    %v1615 = vpop.f32.mrf.mxu0
    %v1616 = vadd.f32 %v1602, %v1615
    %1617 = vdwg.mxu0
    %1618 = vmatpush.bf16.msra.mxu0 %v1191
    %1619 = vmatpush.bf16.msra.mxu0 %v1187
    %1620 = vmatpush.bf16.msra.mxu0 %v1183
    %1621 = vmatpush.bf16.msra.mxu0 %v1179
    %1622 = vmatpush.bf16.msra.mxu0 %v1175
    %1623 = vmatpush.bf16.msra.mxu0 %v1171
    %1624 = vmatpush.bf16.msra.mxu0 %v1167
    %1625 = vmatpush.bf16.msra.mxu0 %v1163
    %1626 = vmatmul.bf16.gmra.mxu0 %v321
    %v1627 = vpop.f32.mrf.mxu0
    %v1628 = vadd.f32 %v1614, %v1627
    %v1629 = vpop.f32.mrf.mxu0
    %v1630 = vadd.f32 %v1616, %v1629
    %1631 = vdwg.mxu0
    %1632 = vmatpush.bf16.msra.mxu0 %v1223
    %1633 = vmatpush.bf16.msra.mxu0 %v1219
    %1634 = vmatpush.bf16.msra.mxu0 %v1215
    %1635 = vmatpush.bf16.msra.mxu0 %v1211
    %1636 = vmatpush.bf16.msra.mxu0 %v1207
    %1637 = vmatpush.bf16.msra.mxu0 %v1203
    %1638 = vmatpush.bf16.msra.mxu0 %v1199
    %1639 = vmatpush.bf16.msra.mxu0 %v1195
    %1640 = vmatmul.bf16.gmra.mxu0 %v322
    %v1641 = vpop.f32.mrf.mxu0
    %v1642 = vadd.f32 %v1628, %v1641
    %v1643 = vpop.f32.mrf.mxu0
    %v1644 = vadd.f32 %v1630, %v1643
    %1645 = vdwg.mxu0
    %1646 = vmatpush.bf16.msra.mxu0 %v1032
    %1647 = vmatpush.bf16.msra.mxu0 %v1028
    %1648 = vmatpush.bf16.msra.mxu0 %v1024
    %1649 = vmatpush.bf16.msra.mxu0 %v1020
    %1650 = vmatpush.bf16.msra.mxu0 %v1016
    %1651 = vmatpush.bf16.msra.mxu0 %v1012
    %1652 = vmatpush.bf16.msra.mxu0 %v1008
    %1653 = vmatpush.bf16.msra.mxu0 %v1004
    %1654 = vmatmul.bf16.gmra.mxu0 %v316
    %v1655 = vpop.f32.mrf.mxu0
    %v1656 = vadd.f32 %v288, %v1655
    %v1657 = vpop.f32.mrf.mxu0
    %v1658 = vadd.f32 %v288, %v1657
    %1659 = vdwg.mxu0
    %1660 = vmatpush.bf16.msra.mxu0 %v1064
    %1661 = vmatpush.bf16.msra.mxu0 %v1060
    %1662 = vmatpush.bf16.msra.mxu0 %v1056
    %1663 = vmatpush.bf16.msra.mxu0 %v1052
    %1664 = vmatpush.bf16.msra.mxu0 %v1048
    %1665 = vmatpush.bf16.msra.mxu0 %v1044
    %1666 = vmatpush.bf16.msra.mxu0 %v1040
    %1667 = vmatpush.bf16.msra.mxu0 %v1036
    %1668 = vmatmul.bf16.gmra.mxu0 %v317
    %v1669 = vpop.f32.mrf.mxu0
    %v1670 = vadd.f32 %v1656, %v1669
    %v1671 = vpop.f32.mrf.mxu0
    %v1672 = vadd.f32 %v1658, %v1671
    %1673 = vdwg.mxu0
    %1674 = vmatpush.bf16.msra.mxu0 %v1096
    %1675 = vmatpush.bf16.msra.mxu0 %v1092
    %1676 = vmatpush.bf16.msra.mxu0 %v1088
    %1677 = vmatpush.bf16.msra.mxu0 %v1084
    %1678 = vmatpush.bf16.msra.mxu0 %v1080
    %1679 = vmatpush.bf16.msra.mxu0 %v1076
    %1680 = vmatpush.bf16.msra.mxu0 %v1072
    %1681 = vmatpush.bf16.msra.mxu0 %v1068
    %1682 = vmatmul.bf16.gmra.mxu0 %v318
    %v1683 = vpop.f32.mrf.mxu0
    %v1684 = vadd.f32 %v1670, %v1683
    %v1685 = vpop.f32.mrf.mxu0
    %v1686 = vadd.f32 %v1672, %v1685
    %1687 = vdwg.mxu0
    %1688 = vmatpush.bf16.msra.mxu0 %v1128
    %1689 = vmatpush.bf16.msra.mxu0 %v1124
    %1690 = vmatpush.bf16.msra.mxu0 %v1120
    %1691 = vmatpush.bf16.msra.mxu0 %v1116
    %1692 = vmatpush.bf16.msra.mxu0 %v1112
    %1693 = vmatpush.bf16.msra.mxu0 %v1108
    %1694 = vmatpush.bf16.msra.mxu0 %v1104
    %1695 = vmatpush.bf16.msra.mxu0 %v1100
    %1696 = vmatmul.bf16.gmra.mxu0 %v319
    %v1697 = vpop.f32.mrf.mxu0
    %v1698 = vadd.f32 %v1684, %v1697
    %v1699 = vpop.f32.mrf.mxu0
    %v1700 = vadd.f32 %v1686, %v1699
    %1701 = vdwg.mxu0
    %1702 = vmatpush.bf16.msra.mxu0 %v1160
    %1703 = vmatpush.bf16.msra.mxu0 %v1156
    %1704 = vmatpush.bf16.msra.mxu0 %v1152
    %1705 = vmatpush.bf16.msra.mxu0 %v1148
    %1706 = vmatpush.bf16.msra.mxu0 %v1144
    %1707 = vmatpush.bf16.msra.mxu0 %v1140
    %1708 = vmatpush.bf16.msra.mxu0 %v1136
    %1709 = vmatpush.bf16.msra.mxu0 %v1132
    %1710 = vmatmul.bf16.gmra.mxu0 %v320
    %v1711 = vpop.f32.mrf.mxu0
    %v1712 = vadd.f32 %v1698, %v1711
    %v1713 = vpop.f32.mrf.mxu0
    %v1714 = vadd.f32 %v1700, %v1713
    %1715 = vdwg.mxu0
    %1716 = vmatpush.bf16.msra.mxu0 %v1192
    %1717 = vmatpush.bf16.msra.mxu0 %v1188
    %1718 = vmatpush.bf16.msra.mxu0 %v1184
    %1719 = vmatpush.bf16.msra.mxu0 %v1180
    %1720 = vmatpush.bf16.msra.mxu0 %v1176
    %1721 = vmatpush.bf16.msra.mxu0 %v1172
    %1722 = vmatpush.bf16.msra.mxu0 %v1168
    %1723 = vmatpush.bf16.msra.mxu0 %v1164
    %1724 = vmatmul.bf16.gmra.mxu0 %v321
    %v1725 = vpop.f32.mrf.mxu0
    %v1726 = vadd.f32 %v1712, %v1725
    %v1727 = vpop.f32.mrf.mxu0
    %v1728 = vadd.f32 %v1714, %v1727
    %1729 = vdwg.mxu0
    %1730 = vmatpush.bf16.msra.mxu0 %v1224
    %1731 = vmatpush.bf16.msra.mxu0 %v1220
    %1732 = vmatpush.bf16.msra.mxu0 %v1216
    %1733 = vmatpush.bf16.msra.mxu0 %v1212
    %1734 = vmatpush.bf16.msra.mxu0 %v1208
    %1735 = vmatpush.bf16.msra.mxu0 %v1204
    %1736 = vmatpush.bf16.msra.mxu0 %v1200
    %1737 = vmatpush.bf16.msra.mxu0 %v1196
    %1738 = vmatmul.bf16.gmra.mxu0 %v322
    %v1739 = vpop.f32.mrf.mxu0
    %v1740 = vadd.f32 %v1726, %v1739
    %v1741 = vpop.f32.mrf.mxu0
    %v1742 = vadd.f32 %v1728, %v1741
    %1743 = vdwg.mxu0
    %1744 = vmatpush.bf16.msra.mxu0 %v1033
    %1745 = vmatpush.bf16.msra.mxu0 %v1029
    %1746 = vmatpush.bf16.msra.mxu0 %v1025
    %1747 = vmatpush.bf16.msra.mxu0 %v1021
    %1748 = vmatpush.bf16.msra.mxu0 %v1017
    %1749 = vmatpush.bf16.msra.mxu0 %v1013
    %1750 = vmatpush.bf16.msra.mxu0 %v1009
    %1751 = vmatpush.bf16.msra.mxu0 %v1005
    %1752 = vmatmul.bf16.gmra.mxu0 %v316
    %v1753 = vpop.f32.mrf.mxu0
    %v1754 = vadd.f32 %v289, %v1753
    %v1755 = vpop.f32.mrf.mxu0
    %v1756 = vadd.f32 %v289, %v1755
    %1757 = vdwg.mxu0
    %1758 = vmatpush.bf16.msra.mxu0 %v1065
    %1759 = vmatpush.bf16.msra.mxu0 %v1061
    %1760 = vmatpush.bf16.msra.mxu0 %v1057
    %1761 = vmatpush.bf16.msra.mxu0 %v1053
    %1762 = vmatpush.bf16.msra.mxu0 %v1049
    %1763 = vmatpush.bf16.msra.mxu0 %v1045
    %1764 = vmatpush.bf16.msra.mxu0 %v1041
    %1765 = vmatpush.bf16.msra.mxu0 %v1037
    %1766 = vmatmul.bf16.gmra.mxu0 %v317
    %v1767 = vpop.f32.mrf.mxu0
    %v1768 = vadd.f32 %v1754, %v1767
    %v1769 = vpop.f32.mrf.mxu0
    %v1770 = vadd.f32 %v1756, %v1769
    %1771 = vdwg.mxu0
    %1772 = vmatpush.bf16.msra.mxu0 %v1097
    %1773 = vmatpush.bf16.msra.mxu0 %v1093
    %1774 = vmatpush.bf16.msra.mxu0 %v1089
    %1775 = vmatpush.bf16.msra.mxu0 %v1085
    %1776 = vmatpush.bf16.msra.mxu0 %v1081
    %1777 = vmatpush.bf16.msra.mxu0 %v1077
    %1778 = vmatpush.bf16.msra.mxu0 %v1073
    %1779 = vmatpush.bf16.msra.mxu0 %v1069
    %1780 = vmatmul.bf16.gmra.mxu0 %v318
    %v1781 = vpop.f32.mrf.mxu0
    %v1782 = vadd.f32 %v1768, %v1781
    %v1783 = vpop.f32.mrf.mxu0
    %v1784 = vadd.f32 %v1770, %v1783
    %1785 = vdwg.mxu0
    %1786 = vmatpush.bf16.msra.mxu0 %v1129
    %1787 = vmatpush.bf16.msra.mxu0 %v1125
    %1788 = vmatpush.bf16.msra.mxu0 %v1121
    %1789 = vmatpush.bf16.msra.mxu0 %v1117
    %1790 = vmatpush.bf16.msra.mxu0 %v1113
    %1791 = vmatpush.bf16.msra.mxu0 %v1109
    %1792 = vmatpush.bf16.msra.mxu0 %v1105
    %1793 = vmatpush.bf16.msra.mxu0 %v1101
    %1794 = vmatmul.bf16.gmra.mxu0 %v319
    %v1795 = vpop.f32.mrf.mxu0
    %v1796 = vadd.f32 %v1782, %v1795
    %v1797 = vpop.f32.mrf.mxu0
    %v1798 = vadd.f32 %v1784, %v1797
    %1799 = vdwg.mxu0
    %1800 = vmatpush.bf16.msra.mxu0 %v1161
    %1801 = vmatpush.bf16.msra.mxu0 %v1157
    %1802 = vmatpush.bf16.msra.mxu0 %v1153
    %1803 = vmatpush.bf16.msra.mxu0 %v1149
    %1804 = vmatpush.bf16.msra.mxu0 %v1145
    %1805 = vmatpush.bf16.msra.mxu0 %v1141
    %1806 = vmatpush.bf16.msra.mxu0 %v1137
    %1807 = vmatpush.bf16.msra.mxu0 %v1133
    %1808 = vmatmul.bf16.gmra.mxu0 %v320
    %v1809 = vpop.f32.mrf.mxu0
    %v1810 = vadd.f32 %v1796, %v1809
    %v1811 = vpop.f32.mrf.mxu0
    %v1812 = vadd.f32 %v1798, %v1811
    %1813 = vdwg.mxu0
    %1814 = vmatpush.bf16.msra.mxu0 %v1193
    %1815 = vmatpush.bf16.msra.mxu0 %v1189
    %1816 = vmatpush.bf16.msra.mxu0 %v1185
    %1817 = vmatpush.bf16.msra.mxu0 %v1181
    %1818 = vmatpush.bf16.msra.mxu0 %v1177
    %1819 = vmatpush.bf16.msra.mxu0 %v1173
    %1820 = vmatpush.bf16.msra.mxu0 %v1169
    %1821 = vmatpush.bf16.msra.mxu0 %v1165
    %1822 = vmatmul.bf16.gmra.mxu0 %v321
    %v1823 = vpop.f32.mrf.mxu0
    %v1824 = vadd.f32 %v1810, %v1823
    %v1825 = vpop.f32.mrf.mxu0
    %v1826 = vadd.f32 %v1812, %v1825
    %1827 = vdwg.mxu0
    %1828 = vmatpush.bf16.msra.mxu0 %v1225
    %1829 = vmatpush.bf16.msra.mxu0 %v1221
    %1830 = vmatpush.bf16.msra.mxu0 %v1217
    %1831 = vmatpush.bf16.msra.mxu0 %v1213
    %1832 = vmatpush.bf16.msra.mxu0 %v1209
    %1833 = vmatpush.bf16.msra.mxu0 %v1205
    %1834 = vmatpush.bf16.msra.mxu0 %v1201
    %1835 = vmatpush.bf16.msra.mxu0 %v1197
    %1836 = vmatmul.bf16.gmra.mxu0 %v322
    %v1837 = vpop.f32.mrf.mxu0
    %v1838 = vadd.f32 %v1824, %v1837
    %v1839 = vpop.f32.mrf.mxu0
    %v1840 = vadd.f32 %v1826, %v1839
    %1841 = vdwg.mxu0
    %v1842 = vmax.f32 %v1544, 0.0
    %v1843 = vmax.f32 %v1642, 0.0
    %v1844 = vmax.f32 %v1740, 0.0
    %v1845 = vmax.f32 %v1838, 0.0
    %v1846 = vmax.f32 %v1546, 0.0
    %v1847 = vmax.f32 %v1644, 0.0
    %v1848 = vmax.f32 %v1742, 0.0
    %v1849 = vmax.f32 %v1840, 0.0
    %v1850 = vpack.c.bf16 %v1846, %v1842
    %v1851 = vpack.c.bf16 %v1847, %v1843
    %v1852 = vpack.c.bf16 %v1848, %v1844
    %v1853 = vpack.c.bf16 %v1849, %v1845
    %v1854 = vld [vmem:[#allocation4] sm:$0xf]
    %v1855 = vld [vmem:[#allocation4 + $0x4] sm:$0xf]
    %v1856 = vld [vmem:[#allocation4 + $0x8] sm:$0xf]
    %v1857 = vld [vmem:[#allocation4 + $0xc] sm:$0xf]
    %v1858 = vld [vmem:[#allocation4 + $0x10] sm:$0xf]
    %v1859 = vld [vmem:[#allocation4 + $0x14] sm:$0xf]
    %v1860 = vld [vmem:[#allocation4 + $0x18] sm:$0xf]
    %v1861 = vld [vmem:[#allocation4 + $0x1c] sm:$0xf]
    %v1862 = vld [vmem:[#allocation4 + $0x20] sm:$0xf]
    %v1863 = vld [vmem:[#allocation4 + $0x24] sm:$0xf]
    %v1864 = vld [vmem:[#allocation4 + $0x28] sm:$0xf]
    %v1865 = vld [vmem:[#allocation4 + $0x2c] sm:$0xf]
    %v1866 = vld [vmem:[#allocation4 + $0x30] sm:$0xf]
    %v1867 = vld [vmem:[#allocation4 + $0x34] sm:$0xf]
    %v1868 = vld [vmem:[#allocation4 + $0x38] sm:$0xf]
    %v1869 = vld [vmem:[#allocation4 + $0x3c] sm:$0xf]
    %v1870 = vld [vmem:[#allocation4 + $0x40] sm:$0xf]
    %v1871 = vld [vmem:[#allocation4 + $0x44] sm:$0xf]
    %v1872 = vld [vmem:[#allocation4 + $0x48] sm:$0xf]
    %v1873 = vld [vmem:[#allocation4 + $0x4c] sm:$0xf]
    %v1874 = vld [vmem:[#allocation4 + $0x50] sm:$0xf]
    %v1875 = vld [vmem:[#allocation4 + $0x54] sm:$0xf]
    %v1876 = vld [vmem:[#allocation4 + $0x58] sm:$0xf]
    %v1877 = vld [vmem:[#allocation4 + $0x5c] sm:$0xf]
    %v1878 = vld [vmem:[#allocation4 + $0x60] sm:$0xf]
    %v1879 = vld [vmem:[#allocation4 + $0x64] sm:$0xf]
    %v1880 = vld [vmem:[#allocation4 + $0x68] sm:$0xf]
    %v1881 = vld [vmem:[#allocation4 + $0x6c] sm:$0xf]
    %v1882 = vld [vmem:[#allocation4 + $0x70] sm:$0xf]
    %v1883 = vld [vmem:[#allocation4 + $0x74] sm:$0xf]
    %v1884 = vld [vmem:[#allocation4 + $0x78] sm:$0xf]
    %v1885 = vld [vmem:[#allocation4 + $0x7c] sm:$0xf]
    %v1886 = vld [vmem:[#allocation4 + $0x80] sm:$0xf]
    %v1887 = vld [vmem:[#allocation4 + $0x84] sm:$0xf]
    %v1888 = vld [vmem:[#allocation4 + $0x88] sm:$0xf]
    %v1889 = vld [vmem:[#allocation4 + $0x8c] sm:$0xf]
    %v1890 = vld [vmem:[#allocation4 + $0x90] sm:$0xf]
    %v1891 = vld [vmem:[#allocation4 + $0x94] sm:$0xf]
    %v1892 = vld [vmem:[#allocation4 + $0x98] sm:$0xf]
    %v1893 = vld [vmem:[#allocation4 + $0x9c] sm:$0xf]
    %v1894 = vld [vmem:[#allocation4 + $0xa0] sm:$0xf]
    %v1895 = vld [vmem:[#allocation4 + $0xa4] sm:$0xf]
    %v1896 = vld [vmem:[#allocation4 + $0xa8] sm:$0xf]
    %v1897 = vld [vmem:[#allocation4 + $0xac] sm:$0xf]
    %v1898 = vld [vmem:[#allocation4 + $0xb0] sm:$0xf]
    %v1899 = vld [vmem:[#allocation4 + $0xb4] sm:$0xf]
    %v1900 = vld [vmem:[#allocation4 + $0xb8] sm:$0xf]
    %v1901 = vld [vmem:[#allocation4 + $0xbc] sm:$0xf]
    %v1902 = vld [vmem:[#allocation4 + $0xc0] sm:$0xf]
    %v1903 = vld [vmem:[#allocation4 + $0xc4] sm:$0xf]
    %v1904 = vld [vmem:[#allocation4 + $0xc8] sm:$0xf]
    %v1905 = vld [vmem:[#allocation4 + $0xcc] sm:$0xf]
    %v1906 = vld [vmem:[#allocation4 + $0xd0] sm:$0xf]
    %v1907 = vld [vmem:[#allocation4 + $0xd4] sm:$0xf]
    %v1908 = vld [vmem:[#allocation4 + $0xd8] sm:$0xf]
    %v1909 = vld [vmem:[#allocation4 + $0xdc] sm:$0xf]
    %v1910 = vld [vmem:[#allocation4 + $0xe0] sm:$0xf]
    %v1911 = vld [vmem:[#allocation4 + $0xe4] sm:$0xf]
    %v1912 = vld [vmem:[#allocation4 + $0xe8] sm:$0xf]
    %v1913 = vld [vmem:[#allocation4 + $0xec] sm:$0xf]
    %v1914 = vld [vmem:[#allocation4 + $0xf0] sm:$0xf]
    %v1915 = vld [vmem:[#allocation4 + $0xf4] sm:$0xf]
    %v1916 = vld [vmem:[#allocation4 + $0xf8] sm:$0xf]
    %v1917 = vld [vmem:[#allocation4 + $0xfc] sm:$0xf]
    %v1918 = vld [vmem:[%s4] sm:$0x1]
    %v1920 = vperm.slane %v1918, 0
    %v1986 = vunpack.c.l.b16 %v1854
    %v1987 = vunpack.c.l.b16 %v1855
    %v1988 = vunpack.c.l.b16 %v1856
    %v1989 = vunpack.c.l.b16 %v1857
    %v1990 = vunpack.c.l.b16 %v1858
    %v1991 = vunpack.c.l.b16 %v1859
    %v1992 = vunpack.c.l.b16 %v1860
    %v1993 = vunpack.c.l.b16 %v1861
    %v1994 = vunpack.c.l.b16 %v1862
    %v1995 = vunpack.c.l.b16 %v1863
    %v1996 = vunpack.c.l.b16 %v1864
    %v1997 = vunpack.c.l.b16 %v1865
    %v1998 = vunpack.c.l.b16 %v1866
    %v1999 = vunpack.c.l.b16 %v1867
    %v2000 = vunpack.c.l.b16 %v1868
    %v2001 = vunpack.c.l.b16 %v1869
    %v2002 = vunpack.c.l.b16 %v1870
    %v2003 = vunpack.c.l.b16 %v1871
    %v2004 = vunpack.c.l.b16 %v1872
    %v2005 = vunpack.c.l.b16 %v1873
    %v2006 = vunpack.c.l.b16 %v1874
    %v2007 = vunpack.c.l.b16 %v1875
    %v2008 = vunpack.c.l.b16 %v1876
    %v2009 = vunpack.c.l.b16 %v1877
    %v2010 = vunpack.c.l.b16 %v1878
    %v2011 = vunpack.c.l.b16 %v1879
    %v2012 = vunpack.c.l.b16 %v1880
    %v2013 = vunpack.c.l.b16 %v1881
    %v2014 = vunpack.c.l.b16 %v1882
    %v2015 = vunpack.c.l.b16 %v1883
    %v2016 = vunpack.c.l.b16 %v1884
    %v2017 = vunpack.c.l.b16 %v1885
    %v2018 = vunpack.c.l.b16 %v1886
    %v2019 = vunpack.c.l.b16 %v1887
    %v2020 = vunpack.c.l.b16 %v1888
    %v2021 = vunpack.c.l.b16 %v1889
    %v2022 = vunpack.c.l.b16 %v1890
    %v2023 = vunpack.c.l.b16 %v1891
    %v2024 = vunpack.c.l.b16 %v1892
    %v2025 = vunpack.c.l.b16 %v1893
    %v2026 = vunpack.c.l.b16 %v1894
    %v2027 = vunpack.c.l.b16 %v1895
    %v2028 = vunpack.c.l.b16 %v1896
    %v2029 = vunpack.c.l.b16 %v1897
    %v2030 = vunpack.c.l.b16 %v1898
    %v2031 = vunpack.c.l.b16 %v1899
    %v2032 = vunpack.c.l.b16 %v1900
    %v2033 = vunpack.c.l.b16 %v1901
    %v2034 = vunpack.c.l.b16 %v1902
    %v2035 = vunpack.c.l.b16 %v1903
    %v2036 = vunpack.c.l.b16 %v1904
    %v2037 = vunpack.c.l.b16 %v1905
    %v2038 = vunpack.c.l.b16 %v1906
    %v2039 = vunpack.c.l.b16 %v1907
    %v2040 = vunpack.c.l.b16 %v1908
    %v2041 = vunpack.c.l.b16 %v1909
    %v2042 = vunpack.c.l.b16 %v1910
    %v2043 = vunpack.c.l.b16 %v1911
    %v2044 = vunpack.c.l.b16 %v1912
    %v2045 = vunpack.c.l.b16 %v1913
    %v2046 = vunpack.c.l.b16 %v1914
    %v2047 = vunpack.c.l.b16 %v1915
    %v2048 = vunpack.c.l.b16 %v1916
    %v2049 = vunpack.c.l.b16 %v1917
    %v2050 = vpack.c.b16 %v1987, %v1986
    %v2051 = vpack.c.b16 %v1989, %v1988
    %v2052 = vpack.c.b16 %v1991, %v1990
    %v2053 = vpack.c.b16 %v1993, %v1992
    %v2054 = vpack.c.b16 %v1995, %v1994
    %v2055 = vpack.c.b16 %v1997, %v1996
    %v2056 = vpack.c.b16 %v1999, %v1998
    %v2057 = vpack.c.b16 %v2001, %v2000
    %v2058 = vpack.c.b16 %v2003, %v2002
    %v2059 = vpack.c.b16 %v2005, %v2004
    %v2060 = vpack.c.b16 %v2007, %v2006
    %v2061 = vpack.c.b16 %v2009, %v2008
    %v2062 = vpack.c.b16 %v2011, %v2010
    %v2063 = vpack.c.b16 %v2013, %v2012
    %v2064 = vpack.c.b16 %v2015, %v2014
    %v2065 = vpack.c.b16 %v2017, %v2016
    %v2066 = vpack.c.b16 %v2019, %v2018
    %v2067 = vpack.c.b16 %v2021, %v2020
    %v2068 = vpack.c.b16 %v2023, %v2022
    %v2069 = vpack.c.b16 %v2025, %v2024
    %v2070 = vpack.c.b16 %v2027, %v2026
    %v2071 = vpack.c.b16 %v2029, %v2028
    %v2072 = vpack.c.b16 %v2031, %v2030
    %v2073 = vpack.c.b16 %v2033, %v2032
    %v2074 = vpack.c.b16 %v2035, %v2034
    %v2075 = vpack.c.b16 %v2037, %v2036
    %v2076 = vpack.c.b16 %v2039, %v2038
    %v2077 = vpack.c.b16 %v2041, %v2040
    %v2078 = vpack.c.b16 %v2043, %v2042
    %v2079 = vpack.c.b16 %v2045, %v2044
    %v2080 = vpack.c.b16 %v2047, %v2046
    %v2081 = vpack.c.b16 %v2049, %v2048
    %2114 = vmatpush.bf16.msra.mxu0 %v2057
    %2115 = vmatpush.bf16.msra.mxu0 %v2056
    %2116 = vmatpush.bf16.msra.mxu0 %v2055
    %2117 = vmatpush.bf16.msra.mxu0 %v2054
    %2118 = vmatpush.bf16.msra.mxu0 %v2053
    %2119 = vmatpush.bf16.msra.mxu0 %v2052
    %2120 = vmatpush.bf16.msra.mxu0 %v2051
    %2121 = vmatpush.bf16.msra.mxu0 %v2050
    %2122 = vmatmul.bf16.gmra.mxu0 %v1850
    %v2123 = vpop.f32.mrf.mxu0
    %v2124 = vadd.f32 %v1920, %v2123
    %v2125 = vpop.f32.mrf.mxu0
    %v2126 = vadd.f32 %v1920, %v2125
    %2127 = vdwg.mxu0
    %2128 = vmatpush.bf16.msra.mxu0 %v2065
    %2129 = vmatpush.bf16.msra.mxu0 %v2064
    %2130 = vmatpush.bf16.msra.mxu0 %v2063
    %2131 = vmatpush.bf16.msra.mxu0 %v2062
    %2132 = vmatpush.bf16.msra.mxu0 %v2061
    %2133 = vmatpush.bf16.msra.mxu0 %v2060
    %2134 = vmatpush.bf16.msra.mxu0 %v2059
    %2135 = vmatpush.bf16.msra.mxu0 %v2058
    %2136 = vmatmul.bf16.gmra.mxu0 %v1851
    %v2137 = vpop.f32.mrf.mxu0
    %v2138 = vadd.f32 %v2124, %v2137
    %v2139 = vpop.f32.mrf.mxu0
    %v2140 = vadd.f32 %v2126, %v2139
    %2141 = vdwg.mxu0
    %2142 = vmatpush.bf16.msra.mxu0 %v2073
    %2143 = vmatpush.bf16.msra.mxu0 %v2072
    %2144 = vmatpush.bf16.msra.mxu0 %v2071
    %2145 = vmatpush.bf16.msra.mxu0 %v2070
    %2146 = vmatpush.bf16.msra.mxu0 %v2069
    %2147 = vmatpush.bf16.msra.mxu0 %v2068
    %2148 = vmatpush.bf16.msra.mxu0 %v2067
    %2149 = vmatpush.bf16.msra.mxu0 %v2066
    %2150 = vmatmul.bf16.gmra.mxu0 %v1852
    %v2151 = vpop.f32.mrf.mxu0
    %v2152 = vadd.f32 %v2138, %v2151
    %v2153 = vpop.f32.mrf.mxu0
    %v2154 = vadd.f32 %v2140, %v2153
    %2155 = vdwg.mxu0
    %2156 = vmatpush.bf16.msra.mxu0 %v2081
    %2157 = vmatpush.bf16.msra.mxu0 %v2080
    %2158 = vmatpush.bf16.msra.mxu0 %v2079
    %2159 = vmatpush.bf16.msra.mxu0 %v2078
    %2160 = vmatpush.bf16.msra.mxu0 %v2077
    %2161 = vmatpush.bf16.msra.mxu0 %v2076
    %2162 = vmatpush.bf16.msra.mxu0 %v2075
    %2163 = vmatpush.bf16.msra.mxu0 %v2074
    %2164 = vmatmul.bf16.gmra.mxu0 %v1853
    %v2165 = vpop.f32.mrf.mxu0
    %v2166 = vadd.f32 %v2152, %v2165
    %v2167 = vpop.f32.mrf.mxu0
    %v2168 = vadd.f32 %v2154, %v2167
    %2169 = vdwg.mxu0
    %v2170 = vpack.c.bf16 %v2166, %v2166
    %v2171 = vpack.c.bf16 %v2168, %v2168
    %2172 = vst [vmem:[%s5] sm:$0xf] %v2170
    %2173 = vst [vmem:[%s5 + $0x4] sm:$0xf] %v2171
    // Predicated region
    $region30: #{fnn_forward.1} parent=1 // pred_check
      _
    $region31: #{fnn_forward.1} parent=1 // pred_check_branch
      %2175 = sbr.rel (0) target = $region33
    $region32: #{fnn_forward.1} parent=1 // pred_region
      _
    $region33: #{fnn_forward.1} parent=1 // pred_fallthru
      _
    // Predicated region
    $region34: #{fnn_forward.1} parent=1 // pred_check
      _
    $region35: #{fnn_forward.1} parent=1 // pred_check_branch
      %2177 = sbr.rel (0) target = $region37
    $region36: #{fnn_forward.1} parent=1 // pred_region
      _
    $region37: #{fnn_forward.1} parent=1 // pred_fallthru
      _
    %2178 = vsyncpa [#allocation3], 1
    %2179 = vsyncpa [#allocation5], 1

</llo_original>
